<compile_context>
chip_gen: v7x
topology: tpu7x:2x2x1
jax: 0.10.0
libtpu: 0.0.40
codegen_flags: <defaults>
</compile_context>

<pallas_src>
from functools import partial

import jax
import jax.numpy as jnp
from jax import lax
from jax.experimental import pallas as pl
from jax.experimental.pallas import tpu as pltpu


def _encoder_body(x_ref, wq_ref, wk_ref, wv_ref, wo_ref, w1_ref, w2_ref,
                  pvec_ref, b1_ref, out_ref, attn_ref, av_scr,
                  *, num_heads, head_dim, seq, compute_dtype):
    """One batch's (S, D) rows: MHA + residual/LN1 + FFN + residual/LN2.

    pvec_ref packs the nine width-D vectors as rows
    [bq, bk, bv, bo, g1, beta1, b2, g2, beta2].
    attn_ref (optional): (S, H*S) lane-slab, reshaped to (H, S, S) in the wrapper.
    av_scr: (S, D) f32 VMEM scratch holding head-major attention@V results.
    """
    cdt = compute_dtype
    x = x_ref[...]                                       # (S, D) f32

    bq  = pvec_ref[0:1, :]
    bk  = pvec_ref[1:2, :]
    bv  = pvec_ref[2:3, :]
    bo  = pvec_ref[3:4, :]
    g1  = pvec_ref[4:5, :]
    be1 = pvec_ref[5:6, :]
    b2  = pvec_ref[6:7, :]
    g2  = pvec_ref[7:8, :]
    be2 = pvec_ref[8:9, :]

    # --- QKV projections (weights are resident across grid steps) ------------
    xc = x.astype(cdt)
    q = jnp.dot(xc, wq_ref[...], preferred_element_type=jnp.float32) + bq
    k = jnp.dot(xc, wk_ref[...], preferred_element_type=jnp.float32) + bk
    v = jnp.dot(xc, wv_ref[...], preferred_element_type=jnp.float32) + bv

    # Fold the 1/sqrt(head_dim) scale into q once (one multiply over S*D
    # elements instead of H multiplies over S*S score matrices).
    q = q * (1.0 / jnp.sqrt(jnp.float32(head_dim)))

    score_dims = (((1,), (1,)), ((), ()))   # contract last dims; no batch dims
    for h in range(num_heads):               # static unroll; H is small
        c0 = h * head_dim
        q_h = q[:, c0:c0 + head_dim].astype(cdt)
        k_h = k[:, c0:c0 + head_dim].astype(cdt)
        v_h = v[:, c0:c0 + head_dim].astype(cdt)

        # q @ k^T via dot_general: the MXU feed path does the transpose, no
        # explicit k_h.T materialization / XLU relayout.
        s = lax.dot_general(q_h, k_h, dimension_numbers=score_dims,
                            preferred_element_type=jnp.float32)       # (S, S)
        s = s - jnp.max(s, axis=-1, keepdims=True)
        e = jnp.exp(s)
        # Reciprocal on the EUP slot (approx path); denominators are O(S), well
        # inside the approximation's safe range.
        a = e * pl.reciprocal(jnp.sum(e, axis=-1, keepdims=True), approx=True)

        if attn_ref is not None:
            # Incremental per-head store: bounds live ranges, spreads writeback.
            attn_ref[:, h * seq:(h + 1) * seq] = a

        # Head-major (S, hd) slice of the (S, D) scratch so the output
        # projection below is ONE full-K matmul.
        av_scr[:, c0:c0 + head_dim] = jnp.dot(
            a.astype(cdt), v_h, preferred_element_type=jnp.float32)

    # --- output projection: single (S, D) @ (D, D), contraction depth K=D ----
    mha = jnp.dot(av_scr[...].astype(cdt), wo_ref[...],
                  preferred_element_type=jnp.float32) + bo             # (S, D)

    # --- residual + LayerNorm1 (dropout1 = identity, eval mode) --------------
    h1 = x + mha
    mu1 = jnp.mean(h1, axis=-1, keepdims=True)
    var1 = jnp.mean((h1 - mu1) ** 2, axis=-1, keepdims=True)
    o1 = (h1 - mu1) * lax.rsqrt(var1 + 1e-9) * g1 + be1

    # --- FFN: Linear -> ReLU -> (Dropout=id) -> Linear ------------------------
    hid = jnp.dot(o1.astype(cdt), w1_ref[...],
                  preferred_element_type=jnp.float32) + b1_ref[...]
    hid = jnp.maximum(hid, 0.0)
    ffn = jnp.dot(hid.astype(cdt), w2_ref[...],
                  preferred_element_type=jnp.float32) + b2

    # --- residual + LayerNorm2 (dropout2 = identity) --------------------------
    h2 = o1 + ffn
    mu2 = jnp.mean(h2, axis=-1, keepdims=True)
    var2 = jnp.mean((h2 - mu2) ** 2, axis=-1, keepdims=True)
    out_ref[...] = (h2 - mu2) * lax.rsqrt(var2 + 1e-9) * g2 + be2


def encoder_layer(x, params, num_heads, *, return_attention=True,
                  compute_dtype=jnp.float32):
    """Wrapper: accepts torch-layout fused wqkv/bqkv, reorders wrapper-side."""
    B, S, D = x.shape
    H = num_heads
    hd = D // H
    hidden = params["w1"].shape[1]
    BS = B * S

    # Undo torch's per-head [q_h|k_h|v_h] column interleave -> head-major Wq/Wk/Wv.
    w3 = params["wqkv"].reshape(D, H, 3, hd)
    wq = w3[:, :, 0, :].reshape(D, D).astype(compute_dtype)
    wk = w3[:, :, 1, :].reshape(D, D).astype(compute_dtype)
    wv = w3[:, :, 2, :].reshape(D, D).astype(compute_dtype)
    b3 = params["bqkv"].reshape(H, 3, hd)
    bq = b3[:, 0, :].reshape(1, D)
    bk = b3[:, 1, :].reshape(1, D)
    bv = b3[:, 2, :].reshape(1, D)

    wo = params["wo"].astype(compute_dtype)
    w1 = params["w1"].astype(compute_dtype)
    w2 = params["w2"].astype(compute_dtype)

    # Pack the nine width-D vectors into a single (9, D) ref (fewer DMA windows).
    pvec = jnp.concatenate(
        [bq, bk, bv, params["bo"], params["g1"], params["beta1"],
         params["b2"], params["g2"], params["beta2"]],
        axis=0).astype(jnp.float32)

    x_flat = x.reshape(BS, D)

    def make_kernel(emit_attn):
        def kernel(*refs):
            if emit_attn:
                (x_r, wq_r, wk_r, wv_r, wo_r, w1_r, w2_r, pv_r, b1_r,
                 out_r, attn_r, av_scr) = refs
            else:
                (x_r, wq_r, wk_r, wv_r, wo_r, w1_r, w2_r, pv_r, b1_r,
                 out_r, av_scr) = refs
                attn_r = None
            _encoder_body(x_r, wq_r, wk_r, wv_r, wo_r, w1_r, w2_r, pv_r, b1_r,
                          out_r, attn_r, av_scr,
                          num_heads=H, head_dim=hd, seq=S,
                          compute_dtype=compute_dtype)
        return kernel

    def resident(shape):
        n = len(shape)
        return pl.BlockSpec(shape, lambda b: (0,) * n)   # constant -> stays in VMEM

    x_spec    = pl.BlockSpec((S, D), lambda b: (b, 0))
    out_spec  = pl.BlockSpec((S, D), lambda b: (b, 0))
    attn_spec = pl.BlockSpec((S, H * S), lambda b: (b, 0))

    in_specs = [
        x_spec,                       # x rows for this batch
        resident((D, D)),             # wq
        resident((D, D)),             # wk
        resident((D, D)),             # wv
        resident((D, D)),             # wo
        resident((D, hidden)),        # ffn w1
        resident((hidden, D)),        # ffn w2
        resident((9, D)),             # packed biases / layernorm params
        resident((1, hidden)),        # ffn b1
    ]

    flops = (2 * BS * D * (3 * D)              # q/k/v projections
             + 2 * B * H * (S * S * hd) * 2    # scores + attention @ V
             + 2 * BS * D * D                  # output projection
             + 2 * BS * D * hidden * 2)        # FFN
    bytes_accessed = 4 * (BS * D                               # x
                          + 4 * D * D                          # wq/wk/wv, wo
                          + D * hidden + hidden * D            # w1, w2
                          + 9 * D + hidden                     # packed vectors + b1
                          + BS * D                             # out
                          + (BS * H * S if return_attention else 0))
    cost = pl.CostEstimate(flops=flops, transcendentals=B * H * S * S,
                           bytes_accessed=bytes_accessed)

    cparams = pltpu.CompilerParams(
        dimension_semantics=("parallel",),        # batches are independent
        vmem_limit_bytes=32 * 1024 * 1024)        # raise v5e's 16 MiB default

    scratch = [pltpu.VMEM((S, D), jnp.float32)]   # head-major attention@V results

    if return_attention:
        out_flat, attn_flat = pl.pallas_call(
            make_kernel(True),
            grid=(B,),
            in_specs=in_specs,
            out_specs=[out_spec, attn_spec],
            out_shape=[jax.ShapeDtypeStruct((BS, D), jnp.float32),
                       jax.ShapeDtypeStruct((BS, H * S), jnp.float32)],
            scratch_shapes=scratch,
            cost_estimate=cost,
            compiler_params=cparams,
        )(x_flat, wq, wk, wv, wo, w1, w2, pvec, params["b1"])
        out = out_flat.reshape(B, S, D)
        # Layout plumbing back to (B, H, S, S) happens in plain XLA (tiny).
        attn = attn_flat.reshape(B, S, H, S).transpose(0, 2, 1, 3)
        return out, attn

    out_flat = pl.pallas_call(
        make_kernel(False),
        grid=(B,),
        in_specs=in_specs,
        out_specs=out_spec,
        out_shape=jax.ShapeDtypeStruct((BS, D), jnp.float32),
        scratch_shapes=scratch,
        cost_estimate=cost,
        compiler_params=cparams,
    )(x_flat, wq, wk, wv, wo, w1, w2, pvec, params["b1"])
    return out_flat.reshape(B, S, D), None


def encoder_layer_ref(x, p, num_heads):
    """Pure-JAX reference replicating the PyTorch forward (eval mode),
    using the original fused torch-layout wqkv/bqkv."""
    B, S, D = x.shape
    hd = D // num_heads
    qkv = x @ p["wqkv"] + p["bqkv"][0]
    qkv = qkv.reshape(B, S, num_heads, 3 * hd).transpose(0, 2, 1, 3)
    q, k, v = qkv[..., :hd], qkv[..., hd:2 * hd], qkv[..., 2 * hd:]
    scores = jnp.einsum("bhsd,bhtd->bhst", q, k) / jnp.sqrt(jnp.float32(hd))
    attn = jax.nn.softmax(scores, axis=-1)
    vals = jnp.einsum("bhst,bhtd->bhsd", attn, v).transpose(0, 2, 1, 3).reshape(B, S, D)
    mha = vals @ p["wo"] + p["bo"][0]

    def ln(h, g, b):
        mu = h.mean(-1, keepdims=True)
        var = ((h - mu) ** 2).mean(-1, keepdims=True)
        return (h - mu) / jnp.sqrt(var + 1e-9) * g[0] + b[0]

    out1 = ln(x + mha, p["g1"], p["beta1"])
    ffn = jnp.maximum(out1 @ p["w1"] + p["b1"][0], 0.0) @ p["w2"] + p["b2"][0]
    out2 = ln(out1 + ffn, p["g2"], p["beta2"])
    return out2, attn


if __name__ == "__main__":
    # EncoderLayer(D=32, H=4, hidden_mlp_dim=64, dropout_rate=0.1), eval mode.
    B, S, D, H, HID = 2, 8, 32, 4, 64

    key = jax.random.PRNGKey(0)
    keys = jax.random.split(key, 14)
    f32 = jnp.float32

    params = {
        "wqkv": (0.05 * jax.random.normal(keys[0], (D, 3 * D))).astype(f32),
        "bqkv": (0.05 * jax.random.normal(keys[1], (1, 3 * D))).astype(f32),
        "wo":   (0.05 * jax.random.normal(keys[2], (D, D))).astype(f32),
        "bo":   (0.05 * jax.random.normal(keys[3], (1, D))).astype(f32),
        "g1":   (1.0 + 0.05 * jax.random.normal(keys[4], (1, D))).astype(f32),
        "beta1": (0.05 * jax.random.normal(keys[5], (1, D))).astype(f32),
        "w1":   (0.05 * jax.random.normal(keys[6], (D, HID))).astype(f32),
        "b1":   (0.05 * jax.random.normal(keys[7], (1, HID))).astype(f32),
        "w2":   (0.05 * jax.random.normal(keys[8], (HID, D))).astype(f32),
        "b2":   (0.05 * jax.random.normal(keys[9], (1, D))).astype(f32),
        "g2":   (1.0 + 0.05 * jax.random.normal(keys[10], (1, D))).astype(f32),
        "beta2": (0.05 * jax.random.normal(keys[11], (1, D))).astype(f32),
    }

    x = jax.random.normal(keys[12], (B, S, D), dtype=f32)

    out2, attn = encoder_layer(x, params, num_heads=H)
    out2 = jax.block_until_ready(out2)
    attn = jax.block_until_ready(attn)

    # Variant without the attention-weights output (dominant HBM writeback at scale).
    out2_noattn, _ = encoder_layer(x, params, num_heads=H, return_attention=False)
    out2_noattn = jax.block_until_ready(out2_noattn)

    ref_out2, ref_attn = encoder_layer_ref(x, params, num_heads=H)

    assert out2.shape == (B, S, D) and attn.shape == (B, H, S, S)
    # Tolerances account for the approx-reciprocal softmax denominator (~2^-12 rel).
    assert jnp.allclose(out2, ref_out2, atol=2e-3, rtol=2e-3), "out2 mismatch"
    assert jnp.allclose(attn, ref_attn, atol=2e-3, rtol=2e-3), "attention mismatch"
    assert jnp.allclose(out2_noattn, out2, atol=1e-6, rtol=1e-6), "no-attn variant mismatch"

    print("KERNEL_OK")
</pallas_src>

<mosaic_0001>
module attributes {stable_mosaic.version = 11 : i64} {
  func.func @kernel(%arg0: i32, %arg1: memref<8x32xf32, #tpu.memory_space<vmem>>, %arg2: memref<32x32xf32, #tpu.memory_space<vmem>>, %arg3: memref<32x32xf32, #tpu.memory_space<vmem>>, %arg4: memref<32x32xf32, #tpu.memory_space<vmem>>, %arg5: memref<32x32xf32, #tpu.memory_space<vmem>>, %arg6: memref<32x64xf32, #tpu.memory_space<vmem>>, %arg7: memref<64x32xf32, #tpu.memory_space<vmem>>, %arg8: memref<9x32xf32, #tpu.memory_space<vmem>>, %arg9: memref<1x64xf32, #tpu.memory_space<vmem>>, %arg10: memref<8x32xf32, #tpu.memory_space<vmem>>, %arg11: memref<8x32xf32, #tpu.memory_space<vmem>>, %arg12: memref<8x32xf32, #tpu.memory_space<vmem>>) attributes {dimension_semantics = [#tpu.dimension_semantics<parallel>], iteration_bounds = array<i64: 2>, scalar_prefetch = 0 : i64, scratch_operands = 1 : i64, tpu.core_type = #tpu.core_type<tc>, window_params = [{transform_indices = @transform_0, window_bounds = array<i64: 8, 32>}, {pipeline_mode = #tpu.pipeline_mode<synchronous>, transform_indices = @transform_1, window_bounds = array<i64: 32, 32>}, {pipeline_mode = #tpu.pipeline_mode<synchronous>, transform_indices = @transform_2, window_bounds = array<i64: 32, 32>}, {pipeline_mode = #tpu.pipeline_mode<synchronous>, transform_indices = @transform_3, window_bounds = array<i64: 32, 32>}, {pipeline_mode = #tpu.pipeline_mode<synchronous>, transform_indices = @transform_4, window_bounds = array<i64: 32, 32>}, {pipeline_mode = #tpu.pipeline_mode<synchronous>, transform_indices = @transform_5, window_bounds = array<i64: 32, 64>}, {pipeline_mode = #tpu.pipeline_mode<synchronous>, transform_indices = @transform_6, window_bounds = array<i64: 64, 32>}, {pipeline_mode = #tpu.pipeline_mode<synchronous>, transform_indices = @transform_7, window_bounds = array<i64: 9, 32>}, {pipeline_mode = #tpu.pipeline_mode<synchronous>, transform_indices = @transform_8, window_bounds = array<i64: 1, 64>}, {transform_indices = @transform_9, window_bounds = array<i64: 8, 32>}, {transform_indices = @transform_10, window_bounds = array<i64: 8, 32>}]} {
    %c0 = arith.constant 0 : index
    %c0_0 = arith.constant 0 : index
    %0 = vector.load %arg1[%c0, %c0_0] : memref<8x32xf32, #tpu.memory_space<vmem>>, vector<8x32xf32>
    %c0_1 = arith.constant 0 : index
    %c0_2 = arith.constant 0 : index
    %1 = vector.load %arg8[%c0_1, %c0_2] : memref<9x32xf32, #tpu.memory_space<vmem>>, vector<1x32xf32>
    %c1 = arith.constant 1 : index
    %c0_3 = arith.constant 0 : index
    %2 = vector.load %arg8[%c1, %c0_3] : memref<9x32xf32, #tpu.memory_space<vmem>>, vector<1x32xf32>
    %c2 = arith.constant 2 : index
    %c0_4 = arith.constant 0 : index
    %3 = vector.load %arg8[%c2, %c0_4] : memref<9x32xf32, #tpu.memory_space<vmem>>, vector<1x32xf32>
    %c3 = arith.constant 3 : index
    %c0_5 = arith.constant 0 : index
    %4 = vector.load %arg8[%c3, %c0_5] : memref<9x32xf32, #tpu.memory_space<vmem>>, vector<1x32xf32>
    %c4 = arith.constant 4 : index
    %c0_6 = arith.constant 0 : index
    %5 = vector.load %arg8[%c4, %c0_6] : memref<9x32xf32, #tpu.memory_space<vmem>>, vector<1x32xf32>
    %c5 = arith.constant 5 : index
    %c0_7 = arith.constant 0 : index
    %6 = vector.load %arg8[%c5, %c0_7] : memref<9x32xf32, #tpu.memory_space<vmem>>, vector<1x32xf32>
    %c6 = arith.constant 6 : index
    %c0_8 = arith.constant 0 : index
    %7 = vector.load %arg8[%c6, %c0_8] : memref<9x32xf32, #tpu.memory_space<vmem>>, vector<1x32xf32>
    %c7 = arith.constant 7 : index
    %c0_9 = arith.constant 0 : index
    %8 = vector.load %arg8[%c7, %c0_9] : memref<9x32xf32, #tpu.memory_space<vmem>>, vector<1x32xf32>
    %c8 = arith.constant 8 : index
    %c0_10 = arith.constant 0 : index
    %9 = vector.load %arg8[%c8, %c0_10] : memref<9x32xf32, #tpu.memory_space<vmem>>, vector<1x32xf32>
    %c0_11 = arith.constant 0 : index
    %c0_12 = arith.constant 0 : index
    %10 = vector.load %arg2[%c0_11, %c0_12] : memref<32x32xf32, #tpu.memory_space<vmem>>, vector<32x32xf32>
    %cst = arith.constant dense<0.000000e+00> : vector<8x32xf32>
    %11 = tpu.matmul %0, %10, %cst {dimension_numbers = #tpu.dot_dimension_numbers<[1], [0], [0], [1], [0, 0, 1, 1], [], []>} : vector<8x32xf32>, vector<32x32xf32>, vector<8x32xf32> -> vector<8x32xf32>
    %12 = vector.broadcast %1 : vector<1x32xf32> to vector<8x32xf32>
    %13 = arith.addf %11, %12 : vector<8x32xf32>
    %c0_13 = arith.constant 0 : index
    %c0_14 = arith.constant 0 : index
    %14 = vector.load %arg3[%c0_13, %c0_14] : memref<32x32xf32, #tpu.memory_space<vmem>>, vector<32x32xf32>
    %cst_15 = arith.constant dense<0.000000e+00> : vector<8x32xf32>
    %15 = tpu.matmul %0, %14, %cst_15 {dimension_numbers = #tpu.dot_dimension_numbers<[1], [0], [0], [1], [0, 0, 1, 1], [], []>} : vector<8x32xf32>, vector<32x32xf32>, vector<8x32xf32> -> vector<8x32xf32>
    %16 = vector.broadcast %2 : vector<1x32xf32> to vector<8x32xf32>
    %17 = arith.addf %15, %16 : vector<8x32xf32>
    %c0_16 = arith.constant 0 : index
    %c0_17 = arith.constant 0 : index
    %18 = vector.load %arg4[%c0_16, %c0_17] : memref<32x32xf32, #tpu.memory_space<vmem>>, vector<32x32xf32>
    %cst_18 = arith.constant dense<0.000000e+00> : vector<8x32xf32>
    %19 = tpu.matmul %0, %18, %cst_18 {dimension_numbers = #tpu.dot_dimension_numbers<[1], [0], [0], [1], [0, 0, 1, 1], [], []>} : vector<8x32xf32>, vector<32x32xf32>, vector<8x32xf32> -> vector<8x32xf32>
    %20 = vector.broadcast %3 : vector<1x32xf32> to vector<8x32xf32>
    %21 = arith.addf %19, %20 : vector<8x32xf32>
    %cst_19 = arith.constant 8.000000e+00 : f32
    %22 = math.sqrt %cst_19 : f32
    %cst_20 = arith.constant 1.000000e+00 : f32
    %23 = arith.divf %cst_20, %22 : f32
    %24 = vector.broadcast %23 : f32 to vector<8x32xf32>
    %25 = arith.mulf %13, %24 : vector<8x32xf32>
    %26 = vector.extract_strided_slice %25 {offsets = [0, 0], sizes = [8, 8], strides = [1, 1]} : vector<8x32xf32> to vector<8x8xf32>
    %27 = vector.extract_strided_slice %17 {offsets = [0, 0], sizes = [8, 8], strides = [1, 1]} : vector<8x32xf32> to vector<8x8xf32>
    %28 = vector.extract_strided_slice %21 {offsets = [0, 0], sizes = [8, 8], strides = [1, 1]} : vector<8x32xf32> to vector<8x8xf32>
    %cst_21 = arith.constant dense<0.000000e+00> : vector<8x8xf32>
    %29 = tpu.matmul %26, %27, %cst_21 {dimension_numbers = #tpu.dot_dimension_numbers<[1], [1], [0], [0], [0, 0, 1, 0], [], []>} : vector<8x8xf32>, vector<8x8xf32>, vector<8x8xf32> -> vector<8x8xf32>
    %cst_22 = arith.constant dense<0xFF800000> : vector<8xf32>
    %30 = vector.multi_reduction <maximumf>, %29, %cst_22 [1] : vector<8x8xf32> to vector<8xf32>
    %31 = vector.shape_cast %30 : vector<8xf32> to vector<8x1xf32>
    %32 = vector.broadcast %31 : vector<8x1xf32> to vector<8x8xf32>
    %33 = arith.subf %29, %32 : vector<8x8xf32>
    %34 = math.exp %33 : vector<8x8xf32>
    %cst_23 = arith.constant dense<0.000000e+00> : vector<8xf32>
    %35 = vector.multi_reduction <add>, %34, %cst_23 [1] : vector<8x8xf32> to vector<8xf32>
    %36 = vector.shape_cast %35 : vector<8xf32> to vector<8x1xf32>
    %37 = tpu.reciprocal %36 {approx = true} : vector<8x1xf32> -> vector<8x1xf32>
    %38 = vector.broadcast %37 : vector<8x1xf32> to vector<8x8xf32>
    %39 = arith.mulf %34, %38 : vector<8x8xf32>
    %c0_24 = arith.constant 0 : index
    %c0_25 = arith.constant 0 : index
    %40 = vector.load %arg11[%c0_24, %c0_25] : memref<8x32xf32, #tpu.memory_space<vmem>>, vector<8x8xf32>
    tpu.vector_store %arg11[%c0_24, %c0_25], %39 {strides = array<i32>} : memref<8x32xf32, #tpu.memory_space<vmem>>, vector<8x8xf32>,
    %cst_26 = arith.constant dense<0.000000e+00> : vector<8x8xf32>
    %41 = tpu.matmul %39, %28, %cst_26 {dimension_numbers = #tpu.dot_dimension_numbers<[1], [0], [0], [1], [0, 0, 1, 1], [], []>} : vector<8x8xf32>, vector<8x8xf32>, vector<8x8xf32> -> vector<8x8xf32>
    %c0_27 = arith.constant 0 : index
    %c0_28 = arith.constant 0 : index
    %42 = vector.load %arg12[%c0_27, %c0_28] : memref<8x32xf32, #tpu.memory_space<vmem>>, vector<8x8xf32>
    tpu.vector_store %arg12[%c0_27, %c0_28], %41 {strides = array<i32>} : memref<8x32xf32, #tpu.memory_space<vmem>>, vector<8x8xf32>,
    %43 = vector.extract_strided_slice %25 {offsets = [0, 8], sizes = [8, 8], strides = [1, 1]} : vector<8x32xf32> to vector<8x8xf32>
    %44 = vector.extract_strided_slice %17 {offsets = [0, 8], sizes = [8, 8], strides = [1, 1]} : vector<8x32xf32> to vector<8x8xf32>
    %45 = vector.extract_strided_slice %21 {offsets = [0, 8], sizes = [8, 8], strides = [1, 1]} : vector<8x32xf32> to vector<8x8xf32>
    %cst_29 = arith.constant dense<0.000000e+00> : vector<8x8xf32>
    %46 = tpu.matmul %43, %44, %cst_29 {dimension_numbers = #tpu.dot_dimension_numbers<[1], [1], [0], [0], [0, 0, 1, 0], [], []>} : vector<8x8xf32>, vector<8x8xf32>, vector<8x8xf32> -> vector<8x8xf32>
    %cst_30 = arith.constant dense<0xFF800000> : vector<8xf32>
    %47 = vector.multi_reduction <maximumf>, %46, %cst_30 [1] : vector<8x8xf32> to vector<8xf32>
    %48 = vector.shape_cast %47 : vector<8xf32> to vector<8x1xf32>
    %49 = vector.broadcast %48 : vector<8x1xf32> to vector<8x8xf32>
    %50 = arith.subf %46, %49 : vector<8x8xf32>
    %51 = math.exp %50 : vector<8x8xf32>
    %cst_31 = arith.constant dense<0.000000e+00> : vector<8xf32>
    %52 = vector.multi_reduction <add>, %51, %cst_31 [1] : vector<8x8xf32> to vector<8xf32>
    %53 = vector.shape_cast %52 : vector<8xf32> to vector<8x1xf32>
    %54 = tpu.reciprocal %53 {approx = true} : vector<8x1xf32> -> vector<8x1xf32>
    %55 = vector.broadcast %54 : vector<8x1xf32> to vector<8x8xf32>
    %56 = arith.mulf %51, %55 : vector<8x8xf32>
    %c0_32 = arith.constant 0 : index
    %c8_33 = arith.constant 8 : index
    %57 = vector.load %arg11[%c0_32, %c8_33] : memref<8x32xf32, #tpu.memory_space<vmem>>, vector<8x8xf32>
    tpu.vector_store %arg11[%c0_32, %c8_33], %56 {strides = array<i32>} : memref<8x32xf32, #tpu.memory_space<vmem>>, vector<8x8xf32>,
    %cst_34 = arith.constant dense<0.000000e+00> : vector<8x8xf32>
    %58 = tpu.matmul %56, %45, %cst_34 {dimension_numbers = #tpu.dot_dimension_numbers<[1], [0], [0], [1], [0, 0, 1, 1], [], []>} : vector<8x8xf32>, vector<8x8xf32>, vector<8x8xf32> -> vector<8x8xf32>
    %c0_35 = arith.constant 0 : index
    %c8_36 = arith.constant 8 : index
    %59 = vector.load %arg12[%c0_35, %c8_36] : memref<8x32xf32, #tpu.memory_space<vmem>>, vector<8x8xf32>
    tpu.vector_store %arg12[%c0_35, %c8_36], %58 {strides = array<i32>} : memref<8x32xf32, #tpu.memory_space<vmem>>, vector<8x8xf32>,
    %60 = vector.extract_strided_slice %25 {offsets = [0, 16], sizes = [8, 8], strides = [1, 1]} : vector<8x32xf32> to vector<8x8xf32>
    %61 = vector.extract_strided_slice %17 {offsets = [0, 16], sizes = [8, 8], strides = [1, 1]} : vector<8x32xf32> to vector<8x8xf32>
    %62 = vector.extract_strided_slice %21 {offsets = [0, 16], sizes = [8, 8], strides = [1, 1]} : vector<8x32xf32> to vector<8x8xf32>
    %cst_37 = arith.constant dense<0.000000e+00> : vector<8x8xf32>
    %63 = tpu.matmul %60, %61, %cst_37 {dimension_numbers = #tpu.dot_dimension_numbers<[1], [1], [0], [0], [0, 0, 1, 0], [], []>} : vector<8x8xf32>, vector<8x8xf32>, vector<8x8xf32> -> vector<8x8xf32>
    %cst_38 = arith.constant dense<0xFF800000> : vector<8xf32>
    %64 = vector.multi_reduction <maximumf>, %63, %cst_38 [1] : vector<8x8xf32> to vector<8xf32>
    %65 = vector.shape_cast %64 : vector<8xf32> to vector<8x1xf32>
    %66 = vector.broadcast %65 : vector<8x1xf32> to vector<8x8xf32>
    %67 = arith.subf %63, %66 : vector<8x8xf32>
    %68 = math.exp %67 : vector<8x8xf32>
    %cst_39 = arith.constant dense<0.000000e+00> : vector<8xf32>
    %69 = vector.multi_reduction <add>, %68, %cst_39 [1] : vector<8x8xf32> to vector<8xf32>
    %70 = vector.shape_cast %69 : vector<8xf32> to vector<8x1xf32>
    %71 = tpu.reciprocal %70 {approx = true} : vector<8x1xf32> -> vector<8x1xf32>
    %72 = vector.broadcast %71 : vector<8x1xf32> to vector<8x8xf32>
    %73 = arith.mulf %68, %72 : vector<8x8xf32>
    %c0_40 = arith.constant 0 : index
    %c16 = arith.constant 16 : index
    %74 = vector.load %arg11[%c0_40, %c16] : memref<8x32xf32, #tpu.memory_space<vmem>>, vector<8x8xf32>
    tpu.vector_store %arg11[%c0_40, %c16], %73 {strides = array<i32>} : memref<8x32xf32, #tpu.memory_space<vmem>>, vector<8x8xf32>,
    %cst_41 = arith.constant dense<0.000000e+00> : vector<8x8xf32>
    %75 = tpu.matmul %73, %62, %cst_41 {dimension_numbers = #tpu.dot_dimension_numbers<[1], [0], [0], [1], [0, 0, 1, 1], [], []>} : vector<8x8xf32>, vector<8x8xf32>, vector<8x8xf32> -> vector<8x8xf32>
    %c0_42 = arith.constant 0 : index
    %c16_43 = arith.constant 16 : index
    %76 = vector.load %arg12[%c0_42, %c16_43] : memref<8x32xf32, #tpu.memory_space<vmem>>, vector<8x8xf32>
    tpu.vector_store %arg12[%c0_42, %c16_43], %75 {strides = array<i32>} : memref<8x32xf32, #tpu.memory_space<vmem>>, vector<8x8xf32>,
    %77 = vector.extract_strided_slice %25 {offsets = [0, 24], sizes = [8, 8], strides = [1, 1]} : vector<8x32xf32> to vector<8x8xf32>
    %78 = vector.extract_strided_slice %17 {offsets = [0, 24], sizes = [8, 8], strides = [1, 1]} : vector<8x32xf32> to vector<8x8xf32>
    %79 = vector.extract_strided_slice %21 {offsets = [0, 24], sizes = [8, 8], strides = [1, 1]} : vector<8x32xf32> to vector<8x8xf32>
    %cst_44 = arith.constant dense<0.000000e+00> : vector<8x8xf32>
    %80 = tpu.matmul %77, %78, %cst_44 {dimension_numbers = #tpu.dot_dimension_numbers<[1], [1], [0], [0], [0, 0, 1, 0], [], []>} : vector<8x8xf32>, vector<8x8xf32>, vector<8x8xf32> -> vector<8x8xf32>
    %cst_45 = arith.constant dense<0xFF800000> : vector<8xf32>
    %81 = vector.multi_reduction <maximumf>, %80, %cst_45 [1] : vector<8x8xf32> to vector<8xf32>
    %82 = vector.shape_cast %81 : vector<8xf32> to vector<8x1xf32>
    %83 = vector.broadcast %82 : vector<8x1xf32> to vector<8x8xf32>
    %84 = arith.subf %80, %83 : vector<8x8xf32>
    %85 = math.exp %84 : vector<8x8xf32>
    %cst_46 = arith.constant dense<0.000000e+00> : vector<8xf32>
    %86 = vector.multi_reduction <add>, %85, %cst_46 [1] : vector<8x8xf32> to vector<8xf32>
    %87 = vector.shape_cast %86 : vector<8xf32> to vector<8x1xf32>
    %88 = tpu.reciprocal %87 {approx = true} : vector<8x1xf32> -> vector<8x1xf32>
    %89 = vector.broadcast %88 : vector<8x1xf32> to vector<8x8xf32>
    %90 = arith.mulf %85, %89 : vector<8x8xf32>
    %c0_47 = arith.constant 0 : index
    %c24 = arith.constant 24 : index
    %91 = vector.load %arg11[%c0_47, %c24] : memref<8x32xf32, #tpu.memory_space<vmem>>, vector<8x8xf32>
    tpu.vector_store %arg11[%c0_47, %c24], %90 {strides = array<i32>} : memref<8x32xf32, #tpu.memory_space<vmem>>, vector<8x8xf32>,
    %cst_48 = arith.constant dense<0.000000e+00> : vector<8x8xf32>
    %92 = tpu.matmul %90, %79, %cst_48 {dimension_numbers = #tpu.dot_dimension_numbers<[1], [0], [0], [1], [0, 0, 1, 1], [], []>} : vector<8x8xf32>, vector<8x8xf32>, vector<8x8xf32> -> vector<8x8xf32>
    %c0_49 = arith.constant 0 : index
    %c24_50 = arith.constant 24 : index
    %93 = vector.load %arg12[%c0_49, %c24_50] : memref<8x32xf32, #tpu.memory_space<vmem>>, vector<8x8xf32>
    tpu.vector_store %arg12[%c0_49, %c24_50], %92 {strides = array<i32>} : memref<8x32xf32, #tpu.memory_space<vmem>>, vector<8x8xf32>,
    %c0_51 = arith.constant 0 : index
    %c0_52 = arith.constant 0 : index
    %94 = vector.load %arg12[%c0_51, %c0_52] : memref<8x32xf32, #tpu.memory_space<vmem>>, vector<8x32xf32>
    %c0_53 = arith.constant 0 : index
    %c0_54 = arith.constant 0 : index
    %95 = vector.load %arg5[%c0_53, %c0_54] : memref<32x32xf32, #tpu.memory_space<vmem>>, vector<32x32xf32>
    %cst_55 = arith.constant dense<0.000000e+00> : vector<8x32xf32>
    %96 = tpu.matmul %94, %95, %cst_55 {dimension_numbers = #tpu.dot_dimension_numbers<[1], [0], [0], [1], [0, 0, 1, 1], [], []>} : vector<8x32xf32>, vector<32x32xf32>, vector<8x32xf32> -> vector<8x32xf32>
    %97 = vector.broadcast %4 : vector<1x32xf32> to vector<8x32xf32>
    %98 = arith.addf %96, %97 : vector<8x32xf32>
    %99 = arith.addf %0, %98 : vector<8x32xf32>
    %cst_56 = arith.constant dense<0.000000e+00> : vector<8xf32>
    %100 = vector.multi_reduction <add>, %99, %cst_56 [1] : vector<8x32xf32> to vector<8xf32>
    %101 = vector.shape_cast %100 : vector<8xf32> to vector<8x1xf32>
    %cst_57 = arith.constant 3.200000e+01 : f32
    %102 = vector.broadcast %cst_57 : f32 to vector<8x1xf32>
    %103 = arith.divf %101, %102 : vector<8x1xf32>
    %104 = vector.broadcast %103 : vector<8x1xf32> to vector<8x32xf32>
    %105 = arith.subf %99, %104 : vector<8x32xf32>
    %106 = arith.mulf %105, %105 : vector<8x32xf32>
    %cst_58 = arith.constant dense<0.000000e+00> : vector<8xf32>
    %107 = vector.multi_reduction <add>, %106, %cst_58 [1] : vector<8x32xf32> to vector<8xf32>
    %108 = vector.shape_cast %107 : vector<8xf32> to vector<8x1xf32>
    %cst_59 = arith.constant 3.200000e+01 : f32
    %109 = vector.broadcast %cst_59 : f32 to vector<8x1xf32>
    %110 = arith.divf %108, %109 : vector<8x1xf32>
    %111 = vector.broadcast %103 : vector<8x1xf32> to vector<8x32xf32>
    %112 = arith.subf %99, %111 : vector<8x32xf32>
    %cst_60 = arith.constant 9.99999971E-10 : f32
    %113 = vector.broadcast %cst_60 : f32 to vector<8x1xf32>
    %114 = arith.addf %110, %113 : vector<8x1xf32>
    %115 = math.rsqrt %114 : vector<8x1xf32>
    %116 = vector.broadcast %115 : vector<8x1xf32> to vector<8x32xf32>
    %117 = arith.mulf %112, %116 : vector<8x32xf32>
    %118 = vector.broadcast %5 : vector<1x32xf32> to vector<8x32xf32>
    %119 = arith.mulf %117, %118 : vector<8x32xf32>
    %120 = vector.broadcast %6 : vector<1x32xf32> to vector<8x32xf32>
    %121 = arith.addf %119, %120 : vector<8x32xf32>
    %c0_61 = arith.constant 0 : index
    %c0_62 = arith.constant 0 : index
    %122 = vector.load %arg6[%c0_61, %c0_62] : memref<32x64xf32, #tpu.memory_space<vmem>>, vector<32x64xf32>
    %cst_63 = arith.constant dense<0.000000e+00> : vector<8x64xf32>
    %123 = tpu.matmul %121, %122, %cst_63 {dimension_numbers = #tpu.dot_dimension_numbers<[1], [0], [0], [1], [0, 0, 1, 1], [], []>} : vector<8x32xf32>, vector<32x64xf32>, vector<8x64xf32> -> vector<8x64xf32>
    %c0_64 = arith.constant 0 : index
    %c0_65 = arith.constant 0 : index
    %124 = vector.load %arg9[%c0_64, %c0_65] : memref<1x64xf32, #tpu.memory_space<vmem>>, vector<1x64xf32>
    %125 = vector.broadcast %124 : vector<1x64xf32> to vector<8x64xf32>
    %126 = arith.addf %123, %125 : vector<8x64xf32>
    %cst_66 = arith.constant 0.000000e+00 : f32
    %127 = vector.broadcast %cst_66 : f32 to vector<8x64xf32>
    %128 = arith.maximumf %126, %127 : vector<8x64xf32>
    %c0_67 = arith.constant 0 : index
    %c0_68 = arith.constant 0 : index
    %129 = vector.load %arg7[%c0_67, %c0_68] : memref<64x32xf32, #tpu.memory_space<vmem>>, vector<64x32xf32>
    %cst_69 = arith.constant dense<0.000000e+00> : vector<8x32xf32>
    %130 = tpu.matmul %128, %129, %cst_69 {dimension_numbers = #tpu.dot_dimension_numbers<[1], [0], [0], [1], [0, 0, 1, 1], [], []>} : vector<8x64xf32>, vector<64x32xf32>, vector<8x32xf32> -> vector<8x32xf32>
    %131 = vector.broadcast %7 : vector<1x32xf32> to vector<8x32xf32>
    %132 = arith.addf %130, %131 : vector<8x32xf32>
    %133 = arith.addf %121, %132 : vector<8x32xf32>
    %cst_70 = arith.constant dense<0.000000e+00> : vector<8xf32>
    %134 = vector.multi_reduction <add>, %133, %cst_70 [1] : vector<8x32xf32> to vector<8xf32>
    %135 = vector.shape_cast %134 : vector<8xf32> to vector<8x1xf32>
    %cst_71 = arith.constant 3.200000e+01 : f32
    %136 = vector.broadcast %cst_71 : f32 to vector<8x1xf32>
    %137 = arith.divf %135, %136 : vector<8x1xf32>
    %138 = vector.broadcast %137 : vector<8x1xf32> to vector<8x32xf32>
    %139 = arith.subf %133, %138 : vector<8x32xf32>
    %140 = arith.mulf %139, %139 : vector<8x32xf32>
    %cst_72 = arith.constant dense<0.000000e+00> : vector<8xf32>
    %141 = vector.multi_reduction <add>, %140, %cst_72 [1] : vector<8x32xf32> to vector<8xf32>
    %142 = vector.shape_cast %141 : vector<8xf32> to vector<8x1xf32>
    %cst_73 = arith.constant 3.200000e+01 : f32
    %143 = vector.broadcast %cst_73 : f32 to vector<8x1xf32>
    %144 = arith.divf %142, %143 : vector<8x1xf32>
    %145 = vector.broadcast %137 : vector<8x1xf32> to vector<8x32xf32>
    %146 = arith.subf %133, %145 : vector<8x32xf32>
    %cst_74 = arith.constant 9.99999971E-10 : f32
    %147 = vector.broadcast %cst_74 : f32 to vector<8x1xf32>
    %148 = arith.addf %144, %147 : vector<8x1xf32>
    %149 = math.rsqrt %148 : vector<8x1xf32>
    %150 = vector.broadcast %149 : vector<8x1xf32> to vector<8x32xf32>
    %151 = arith.mulf %146, %150 : vector<8x32xf32>
    %152 = vector.broadcast %8 : vector<1x32xf32> to vector<8x32xf32>
    %153 = arith.mulf %151, %152 : vector<8x32xf32>
    %154 = vector.broadcast %9 : vector<1x32xf32> to vector<8x32xf32>
    %155 = arith.addf %153, %154 : vector<8x32xf32>
    %c0_75 = arith.constant 0 : index
    %c0_76 = arith.constant 0 : index
    %156 = vector.load %arg10[%c0_75, %c0_76] : memref<8x32xf32, #tpu.memory_space<vmem>>, vector<8x32xf32>
    tpu.vector_store %arg10[%c0_75, %c0_76], %155 {strides = array<i32>} : memref<8x32xf32, #tpu.memory_space<vmem>>, vector<8x32xf32>,
    return
  }
  func.func @transform_0(%arg0: i32) -> (i32, i32) {
    %c0_i32 = arith.constant 0 : i32
    %c0_i32_0 = arith.constant 0 : i32
    return %arg0, %c0_i32 : i32, i32
  }
  func.func @transform_1(%arg0: i32) -> (i32, i32) {
    %c0_i32 = arith.constant 0 : i32
    %c0_i32_0 = arith.constant 0 : i32
    %c0_i32_1 = arith.constant 0 : i32
    return %c0_i32, %c0_i32_0 : i32, i32
  }
  func.func @transform_2(%arg0: i32) -> (i32, i32) {
    %c0_i32 = arith.constant 0 : i32
    %c0_i32_0 = arith.constant 0 : i32
    %c0_i32_1 = arith.constant 0 : i32
    return %c0_i32, %c0_i32_0 : i32, i32
  }
  func.func @transform_3(%arg0: i32) -> (i32, i32) {
    %c0_i32 = arith.constant 0 : i32
    %c0_i32_0 = arith.constant 0 : i32
    %c0_i32_1 = arith.constant 0 : i32
    return %c0_i32, %c0_i32_0 : i32, i32
  }
  func.func @transform_4(%arg0: i32) -> (i32, i32) {
    %c0_i32 = arith.constant 0 : i32
    %c0_i32_0 = arith.constant 0 : i32
    %c0_i32_1 = arith.constant 0 : i32
    return %c0_i32, %c0_i32_0 : i32, i32
  }
  func.func @transform_5(%arg0: i32) -> (i32, i32) {
    %c0_i32 = arith.constant 0 : i32
    %c0_i32_0 = arith.constant 0 : i32
    %c0_i32_1 = arith.constant 0 : i32
    return %c0_i32, %c0_i32_0 : i32, i32
  }
  func.func @transform_6(%arg0: i32) -> (i32, i32) {
    %c0_i32 = arith.constant 0 : i32
    %c0_i32_0 = arith.constant 0 : i32
    %c0_i32_1 = arith.constant 0 : i32
    return %c0_i32, %c0_i32_0 : i32, i32
  }
  func.func @transform_7(%arg0: i32) -> (i32, i32) {
    %c0_i32 = arith.constant 0 : i32
    %c0_i32_0 = arith.constant 0 : i32
    %c0_i32_1 = arith.constant 0 : i32
    return %c0_i32, %c0_i32_0 : i32, i32
  }
  func.func @transform_8(%arg0: i32) -> (i32, i32) {
    %c0_i32 = arith.constant 0 : i32
    %c0_i32_0 = arith.constant 0 : i32
    %c0_i32_1 = arith.constant 0 : i32
    return %c0_i32, %c0_i32_0 : i32, i32
  }
  func.func @transform_9(%arg0: i32) -> (i32, i32) {
    %c0_i32 = arith.constant 0 : i32
    %c0_i32_0 = arith.constant 0 : i32
    return %arg0, %c0_i32 : i32, i32
  }
  func.func @transform_10(%arg0: i32) -> (i32, i32) {
    %c0_i32 = arith.constant 0 : i32
    %c0_i32_0 = arith.constant 0 : i32
    return %arg0, %c0_i32 : i32, i32
  }
}

</mosaic_0001>

<llo_original>
// kernel: tpu_custom_call.1
$region0: #{tpu_custom_call.1}
  #allocation0 [shape = 'u32[]', space=smem, size = 0x4, offset = 0x4, fixed_abs, tag = 'smem constant byte address 0x4 - core index']
  #allocation1 [shape = 'u32[144,128]{1,0:T(1,128)}', space=vmem, size = 0x12000, scoped, tag = 'internal scratch']
  #allocation2 [shape = 'f32[8,32]{1,0:T(8,128)}', space=vmem, size = 0x1000, scoped, tag = 'scratch operand']
  %s0 = inlined_call_operand.hbm [shape: f32[16,32], index: 0, kind: input, shape index: {}]
  %s1 = inlined_call_operand.vmem [shape: f32[32,32], index: 1, kind: input, shape index: {}]
  %s2 = inlined_call_operand.vmem [shape: f32[32,32], index: 2, kind: input, shape index: {}]
  %s3 = inlined_call_operand.vmem [shape: f32[32,32], index: 3, kind: input, shape index: {}]
  %s4 = inlined_call_operand.hbm [shape: f32[32,32], index: 4, kind: input, shape index: {}]
  %s5 = inlined_call_operand.hbm [shape: f32[32,64], index: 5, kind: input, shape index: {}]
  %s6 = inlined_call_operand.vmem [shape: f32[64,32], index: 6, kind: input, shape index: {}]
  %s7 = inlined_call_operand.vmem [shape: f32[9,32], index: 7, kind: input, shape index: {}]
  %s8 = inlined_call_operand.vmem [shape: f32[1,64], index: 8, kind: input, shape index: {}]
  %s9 = inlined_call_operand.hbm [shape: f32[16,32], index: 9, kind: output, shape index: {0}]
  %s10 = inlined_call_operand.hbm [shape: f32[16,32], index: 10, kind: output, shape index: {1}]
  %11 = xla_tuple %s9, %s10
  %s12 = sld [smem:[#allocation0]]
  $region89: #{tpu_custom_call.1} parent=0
    _
  %s14 = ssub.s32 1, %s12
  %s15 = scalar_select 0, %s14, %s12
  $region1: #{tpu_custom_call.1} parent=0
    #allocation3 [shape = 'u8[8192]{0}', space=vmem, size = 0x2000, scoped, tag = 'input window, operand 0']
    #allocation4 [shape = 's32[2]{0}', space=sflag, size = 0x8, scoped, tag = 'scoped memory for tpu_custom_call.1']
    #allocation5 [shape = 's32[2]{0}', space=sflag, size = 0x8, scoped, tag = 'scoped memory for tpu_custom_call.1']
    #allocation6 [shape = 'u8[16384]{0}', space=vmem, size = 0x4000, scoped, tag = 'input window, operand 4, single buffered']
    #allocation7 [shape = 's32[1]{0}', space=sflag, size = 0x4, scoped, tag = 'scoped memory for tpu_custom_call.1']
    #allocation8 [shape = 'u8[16384]{0}', space=vmem, size = 0x4000, scoped, tag = 'input window, operand 5, single buffered']
    #allocation9 [shape = 'u8[8192]{0}', space=vmem, size = 0x2000, scoped, tag = 'output window, operand 0']
    #allocation10 [shape = 'u8[8192]{0}', space=vmem, size = 0x2000, scoped, tag = 'output window, operand 1']
    #allocation11 [shape = 's32[2]{0}', space=sflag, size = 0x8, scoped, tag = 'scoped memory for tpu_custom_call.1']
    %16 = vsyncpa [#allocation4], 0
    %s17 = scalar_lea.sflag [#allocation4], 1
    %18 = vsyncpa %s17, 0
    %19 = vsyncpa [#allocation7], 0
    %20 = vsyncpa [#allocation5], 0
    %s21 = scalar_lea.sflag [#allocation5], 1
    %22 = vsyncpa %s21, 0
    %23 = vsyncpa [#allocation11], 0
    %s24 = scalar_lea.sflag [#allocation11], 1
    %25 = vsyncpa %s24, 0
    loop: start=0, step=1, limit=4
    $region2: #{tpu_custom_call.1} parent=1 // loop_pre_header
      _
    $region3: #{tpu_custom_call.1} parent=1 // loop_header
      %s27 = sphi 0, %s31
      %p28 = scmp.ge.s32.totalorder %s27, 4
      %s37 = sphi 0, %s39
      %s40 = sphi 0, %s37
      %s41 = sphi 0, %s40
      %s57 = sphi 0, %s41
      %s61 = sphi 0, %s61
      %s63 = sphi 0, %s61
      %s64 = sphi 0, %s63
      %s78 = sphi 0, %s64
      %s82 = sphi 0, %s82
      %s84 = sphi 0, %s82
      %s85 = sphi 0, %s84
      %s99 = sphi 0, %s85
      %s103 = sphi 0, %s103
      %s105 = sphi 0, %s103
      %s106 = sphi 0, %s105
      %s120 = sphi 0, %s106
      %s124 = sphi 0, %s124
      %s126 = sphi 0, %s124
      %s127 = sphi 0, %s126
      %s141 = sphi 0, %s127
      %s145 = sphi 0, %s145
      %s147 = sphi 0, %s145
      %s148 = sphi 0, %s147
      %s162 = sphi 0, %s148
      %s166 = sphi 0, %s166
      %s168 = sphi 0, %s166
      %s169 = sphi 0, %s168
      %s183 = sphi 0, %s169
      %s187 = sphi 0, %s187
      %s189 = sphi 0, %s187
      %s190 = sphi 0, %s189
      %s204 = sphi 0, %s190
      %s208 = sphi 0, %s208
      %s210 = sphi 0, %s208
      %s211 = sphi 0, %s210
      %s225 = sphi 0, %s211
      %s231 = sphi 0, %s233
      %s234 = sphi 0, %s231
      %s235 = sphi 0, %s234
      %s251 = sphi 0, %s235
      %s257 = sphi 0, %s259
      %s260 = sphi 0, %s257
      %s261 = sphi 0, %s260
      %s277 = sphi 0, %s261
    $region4: #{tpu_custom_call.1} parent=1 // loop_header_branch
      %30 = sbr.rel (%p28) target = $region8
    $region5: #{tpu_custom_call.1} parent=1 // loop_body
      %s32 = ssub.s32 %s27, 1
      %s33 = ssub.s32 %s27, 2
      %s34 = sadd.s32 %s27, 1
      %s35 = ssub.s32 %s27, %s34
      %p36 = scmp.eq.s32.totalorder %s35, 0
      %s38 = sadd.s32 %s37, 1
      %s39 = scalar_select %p36, %s37, %s38
      %p42 = pneg %p36
      %p43 = scmp.eq.s32.totalorder %s27, 1
      %p44 = por %p42, %p43
      %p45 = scmp.ne.s32.totalorder %s37, %s40
      %p46 = scmp.eq.s32.totalorder %s27, 0
      %p47 = por %p45, %p46
      %p48 = scmp.ne.s32.totalorder %s37, %s40
      %p49 = scmp.eq.s32.totalorder %s32, 1
      %p50 = por %p48, %p49
      %p51 = scmp.ne.s32.totalorder %s40, %s41
      %p52 = scmp.eq.s32.totalorder %s32, 0
      %p53 = por %p51, %p52
      %p54 = scmp.ne.s32.totalorder %s40, %s41
      %p55 = scmp.eq.s32.totalorder %s33, 1
      %p56 = por %p54, %p55
      %p58 = scmp.ne.s32.totalorder %s41, %s57
      %p59 = scmp.eq.s32.totalorder %s33, 0
      %p60 = por %p58, %p59
      %s62 = sadd.s32 %s61, 1
      %p65 = scmp.eq.s32.totalorder %s27, 1
      %p66 = scmp.ne.s32.totalorder %s61, %s63
      %p67 = scmp.eq.s32.totalorder %s27, 0
      %p68 = por %p66, %p67
      %p69 = scmp.ne.s32.totalorder %s61, %s63
      %p70 = scmp.eq.s32.totalorder %s32, 1
      %p71 = por %p69, %p70
      %p72 = scmp.ne.s32.totalorder %s63, %s64
      %p73 = scmp.eq.s32.totalorder %s32, 0
      %p74 = por %p72, %p73
      %p75 = scmp.ne.s32.totalorder %s63, %s64
      %p76 = scmp.eq.s32.totalorder %s33, 1
      %p77 = por %p75, %p76
      %p79 = scmp.ne.s32.totalorder %s64, %s78
      %p80 = scmp.eq.s32.totalorder %s33, 0
      %p81 = por %p79, %p80
      %s83 = sadd.s32 %s82, 1
      %p86 = scmp.eq.s32.totalorder %s27, 1
      %p87 = scmp.ne.s32.totalorder %s82, %s84
      %p88 = scmp.eq.s32.totalorder %s27, 0
      %p89 = por %p87, %p88
      %p90 = scmp.ne.s32.totalorder %s82, %s84
      %p91 = scmp.eq.s32.totalorder %s32, 1
      %p92 = por %p90, %p91
      %p93 = scmp.ne.s32.totalorder %s84, %s85
      %p94 = scmp.eq.s32.totalorder %s32, 0
      %p95 = por %p93, %p94
      %p96 = scmp.ne.s32.totalorder %s84, %s85
      %p97 = scmp.eq.s32.totalorder %s33, 1
      %p98 = por %p96, %p97
      %p100 = scmp.ne.s32.totalorder %s85, %s99
      %p101 = scmp.eq.s32.totalorder %s33, 0
      %p102 = por %p100, %p101
      %s104 = sadd.s32 %s103, 1
      %p107 = scmp.eq.s32.totalorder %s27, 1
      %p108 = scmp.ne.s32.totalorder %s103, %s105
      %p109 = scmp.eq.s32.totalorder %s27, 0
      %p110 = por %p108, %p109
      %p111 = scmp.ne.s32.totalorder %s103, %s105
      %p112 = scmp.eq.s32.totalorder %s32, 1
      %p113 = por %p111, %p112
      %p114 = scmp.ne.s32.totalorder %s105, %s106
      %p115 = scmp.eq.s32.totalorder %s32, 0
      %p116 = por %p114, %p115
      %p117 = scmp.ne.s32.totalorder %s105, %s106
      %p118 = scmp.eq.s32.totalorder %s33, 1
      %p119 = por %p117, %p118
      %p121 = scmp.ne.s32.totalorder %s106, %s120
      %p122 = scmp.eq.s32.totalorder %s33, 0
      %p123 = por %p121, %p122
      %s125 = sadd.s32 %s124, 1
      %p128 = scmp.eq.s32.totalorder %s27, 1
      %p129 = scmp.ne.s32.totalorder %s124, %s126
      %p130 = scmp.eq.s32.totalorder %s27, 0
      %p131 = por %p129, %p130
      %p132 = scmp.ne.s32.totalorder %s124, %s126
      %p133 = scmp.eq.s32.totalorder %s32, 1
      %p134 = por %p132, %p133
      %p135 = scmp.ne.s32.totalorder %s126, %s127
      %p136 = scmp.eq.s32.totalorder %s32, 0
      %p137 = por %p135, %p136
      %p138 = scmp.ne.s32.totalorder %s126, %s127
      %p139 = scmp.eq.s32.totalorder %s33, 1
      %p140 = por %p138, %p139
      %p142 = scmp.ne.s32.totalorder %s127, %s141
      %p143 = scmp.eq.s32.totalorder %s33, 0
      %p144 = por %p142, %p143
      %s146 = sadd.s32 %s145, 1
      %p149 = scmp.eq.s32.totalorder %s27, 1
      %p150 = scmp.ne.s32.totalorder %s145, %s147
      %p151 = scmp.eq.s32.totalorder %s27, 0
      %p152 = por %p150, %p151
      %p153 = scmp.ne.s32.totalorder %s145, %s147
      %p154 = scmp.eq.s32.totalorder %s32, 1
      %p155 = por %p153, %p154
      %p156 = scmp.ne.s32.totalorder %s147, %s148
      %p157 = scmp.eq.s32.totalorder %s32, 0
      %p158 = por %p156, %p157
      %p159 = scmp.ne.s32.totalorder %s147, %s148
      %p160 = scmp.eq.s32.totalorder %s33, 1
      %p161 = por %p159, %p160
      %p163 = scmp.ne.s32.totalorder %s148, %s162
      %p164 = scmp.eq.s32.totalorder %s33, 0
      %p165 = por %p163, %p164
      %s167 = sadd.s32 %s166, 1
      %p170 = scmp.eq.s32.totalorder %s27, 1
      %p171 = scmp.ne.s32.totalorder %s166, %s168
      %p172 = scmp.eq.s32.totalorder %s27, 0
      %p173 = por %p171, %p172
      %p174 = scmp.ne.s32.totalorder %s166, %s168
      %p175 = scmp.eq.s32.totalorder %s32, 1
      %p176 = por %p174, %p175
      %p177 = scmp.ne.s32.totalorder %s168, %s169
      %p178 = scmp.eq.s32.totalorder %s32, 0
      %p179 = por %p177, %p178
      %p180 = scmp.ne.s32.totalorder %s168, %s169
      %p181 = scmp.eq.s32.totalorder %s33, 1
      %p182 = por %p180, %p181
      %p184 = scmp.ne.s32.totalorder %s169, %s183
      %p185 = scmp.eq.s32.totalorder %s33, 0
      %p186 = por %p184, %p185
      %s188 = sadd.s32 %s187, 1
      %p191 = scmp.eq.s32.totalorder %s27, 1
      %p192 = scmp.ne.s32.totalorder %s187, %s189
      %p193 = scmp.eq.s32.totalorder %s27, 0
      %p194 = por %p192, %p193
      %p195 = scmp.ne.s32.totalorder %s187, %s189
      %p196 = scmp.eq.s32.totalorder %s32, 1
      %p197 = por %p195, %p196
      %p198 = scmp.ne.s32.totalorder %s189, %s190
      %p199 = scmp.eq.s32.totalorder %s32, 0
      %p200 = por %p198, %p199
      %p201 = scmp.ne.s32.totalorder %s189, %s190
      %p202 = scmp.eq.s32.totalorder %s33, 1
      %p203 = por %p201, %p202
      %p205 = scmp.ne.s32.totalorder %s190, %s204
      %p206 = scmp.eq.s32.totalorder %s33, 0
      %p207 = por %p205, %p206
      %s209 = sadd.s32 %s208, 1
      %p212 = scmp.eq.s32.totalorder %s27, 1
      %p213 = scmp.ne.s32.totalorder %s208, %s210
      %p214 = scmp.eq.s32.totalorder %s27, 0
      %p215 = por %p213, %p214
      %p216 = scmp.ne.s32.totalorder %s208, %s210
      %p217 = scmp.eq.s32.totalorder %s32, 1
      %p218 = por %p216, %p217
      %p219 = scmp.ne.s32.totalorder %s210, %s211
      %p220 = scmp.eq.s32.totalorder %s32, 0
      %p221 = por %p219, %p220
      %p222 = scmp.ne.s32.totalorder %s210, %s211
      %p223 = scmp.eq.s32.totalorder %s33, 1
      %p224 = por %p222, %p223
      %p226 = scmp.ne.s32.totalorder %s211, %s225
      %p227 = scmp.eq.s32.totalorder %s33, 0
      %p228 = por %p226, %p227
      %s229 = ssub.s32 %s27, %s34
      %p230 = scmp.eq.s32.totalorder %s229, 0
      %s232 = sadd.s32 %s231, 1
      %s233 = scalar_select %p230, %s231, %s232
      %p236 = pneg %p230
      %p237 = scmp.eq.s32.totalorder %s27, 1
      %p238 = por %p236, %p237
      %p239 = scmp.ne.s32.totalorder %s231, %s234
      %p240 = scmp.eq.s32.totalorder %s27, 0
      %p241 = por %p239, %p240
      %p242 = scmp.ne.s32.totalorder %s231, %s234
      %p243 = scmp.eq.s32.totalorder %s32, 1
      %p244 = por %p242, %p243
      %p245 = scmp.ne.s32.totalorder %s234, %s235
      %p246 = scmp.eq.s32.totalorder %s32, 0
      %p247 = por %p245, %p246
      %p248 = scmp.ne.s32.totalorder %s234, %s235
      %p249 = scmp.eq.s32.totalorder %s33, 1
      %p250 = por %p248, %p249
      %p252 = scmp.ne.s32.totalorder %s235, %s251
      %p253 = scmp.eq.s32.totalorder %s33, 0
      %p254 = por %p252, %p253
      %s255 = ssub.s32 %s27, %s34
      %p256 = scmp.eq.s32.totalorder %s255, 0
      %s258 = sadd.s32 %s257, 1
      %s259 = scalar_select %p256, %s257, %s258
      %p262 = pneg %p256
      %p263 = scmp.eq.s32.totalorder %s27, 1
      %p264 = por %p262, %p263
      %p265 = scmp.ne.s32.totalorder %s257, %s260
      %p266 = scmp.eq.s32.totalorder %s27, 0
      %p267 = por %p265, %p266
      %p268 = scmp.ne.s32.totalorder %s257, %s260
      %p269 = scmp.eq.s32.totalorder %s32, 1
      %p270 = por %p268, %p269
      %p271 = scmp.ne.s32.totalorder %s260, %s261
      %p272 = scmp.eq.s32.totalorder %s32, 0
      %p273 = por %p271, %p272
      %p274 = scmp.ne.s32.totalorder %s260, %s261
      %p275 = scmp.eq.s32.totalorder %s33, 1
      %p276 = por %p274, %p275
      %p278 = scmp.ne.s32.totalorder %s261, %s277
      %p279 = scmp.eq.s32.totalorder %s33, 0
      %p280 = por %p278, %p279
      %p281 = scmp.le.s32.totalorder 1, %s27
      %p282 = scmp.lt.s32.totalorder %s27, 3
      %p283 = pnand %p281, %p282
      %p284 = pneg %p283
      // Predicated region
      $region9: #{tpu_custom_call.1} parent=5 // pred_check
        _
      $region10: #{tpu_custom_call.1} parent=5 // pred_check_branch
        %286 = sbr.rel (%p283) target = $region12
      $region11: #{tpu_custom_call.1} parent=5 // pred_region
        %s287 = ssub.s32 %s27, 1
        // Predicated region
        $region13: #{tpu_custom_call.1} parent=11 // pred_check
          %p288 = pneg %p74
        $region14: #{tpu_custom_call.1} parent=11 // pred_check_branch
          %290 = sbr.rel (%p288) target = $region16
        $region15: #{tpu_custom_call.1} parent=11 // pred_region
          _
        $region16: #{tpu_custom_call.1} parent=11 // pred_fallthru
          _
        // Predicated region
        $region17: #{tpu_custom_call.1} parent=11 // pred_check
          %p291 = pneg %p95
        $region18: #{tpu_custom_call.1} parent=11 // pred_check_branch
          %293 = sbr.rel (%p291) target = $region20
        $region19: #{tpu_custom_call.1} parent=11 // pred_region
          _
        $region20: #{tpu_custom_call.1} parent=11 // pred_fallthru
          _
        // Predicated region
        $region21: #{tpu_custom_call.1} parent=11 // pred_check
          %p294 = pneg %p116
        $region22: #{tpu_custom_call.1} parent=11 // pred_check_branch
          %296 = sbr.rel (%p294) target = $region24
        $region23: #{tpu_custom_call.1} parent=11 // pred_region
          _
        $region24: #{tpu_custom_call.1} parent=11 // pred_fallthru
          _
        // Predicated region
        $region25: #{tpu_custom_call.1} parent=11 // pred_check
          %p297 = pneg %p137
        $region26: #{tpu_custom_call.1} parent=11 // pred_check_branch
          %299 = sbr.rel (%p297) target = $region28
        $region27: #{tpu_custom_call.1} parent=11 // pred_region
          %s301 = ssub.s32 512, 512
          %302 = vsyncadd [#allocation7], %s301
          %s303 = sshll.u32 [#allocation6], 4
          %s304 = int_to_ptr.vmem [resolvable:$true] %s303
          %309 = dma.hbm_to_vmem [thread:$0]  %s4, 512, %s304, [#allocation7], 128, 128, 8
        $region28: #{tpu_custom_call.1} parent=11 // pred_fallthru
          _
        // Predicated region
        $region29: #{tpu_custom_call.1} parent=11 // pred_check
          %p310 = pneg %p158
        $region30: #{tpu_custom_call.1} parent=11 // pred_check_branch
          %312 = sbr.rel (%p310) target = $region32
        $region31: #{tpu_custom_call.1} parent=11 // pred_region
          %s314 = ssub.s32 512, 512
          %315 = vsyncadd [#allocation7], %s314
          %s316 = sshll.u32 [#allocation8], 4
          %s317 = int_to_ptr.vmem [resolvable:$true] %s316
          %322 = dma.hbm_to_vmem [thread:$0]  %s5, 512, %s317, [#allocation7], 128, 128, 8
        $region32: #{tpu_custom_call.1} parent=11 // pred_fallthru
          _
        // Predicated region
        $region33: #{tpu_custom_call.1} parent=11 // pred_check
          %p323 = pneg %p179
        $region34: #{tpu_custom_call.1} parent=11 // pred_check_branch
          %325 = sbr.rel (%p323) target = $region36
        $region35: #{tpu_custom_call.1} parent=11 // pred_region
          _
        $region36: #{tpu_custom_call.1} parent=11 // pred_fallthru
          _
        // Predicated region
        $region37: #{tpu_custom_call.1} parent=11 // pred_check
          %p326 = pneg %p200
        $region38: #{tpu_custom_call.1} parent=11 // pred_check_branch
          %328 = sbr.rel (%p326) target = $region40
        $region39: #{tpu_custom_call.1} parent=11 // pred_region
          _
        $region40: #{tpu_custom_call.1} parent=11 // pred_fallthru
          _
        // Predicated region
        $region41: #{tpu_custom_call.1} parent=11 // pred_check
          %p329 = pneg %p221
        $region42: #{tpu_custom_call.1} parent=11 // pred_check_branch
          %331 = sbr.rel (%p329) target = $region44
        $region43: #{tpu_custom_call.1} parent=11 // pred_region
          _
        $region44: #{tpu_custom_call.1} parent=11 // pred_fallthru
          _
      $region12: #{tpu_custom_call.1} parent=5 // pred_fallthru
        _
      %p332 = scmp.lt.s32.totalorder %s27, 2
      // Predicated region
      $region45: #{tpu_custom_call.1} parent=5 // pred_check
        %p333 = pneg %p332
      $region46: #{tpu_custom_call.1} parent=5 // pred_check_branch
        %335 = sbr.rel (%p333) target = $region48
      $region47: #{tpu_custom_call.1} parent=5 // pred_region
        // Predicated region
        $region49: #{tpu_custom_call.1} parent=47 // pred_check
          %p336 = pneg %p47
        $region50: #{tpu_custom_call.1} parent=47 // pred_check_branch
          %338 = sbr.rel (%p336) target = $region52
        $region51: #{tpu_custom_call.1} parent=47 // pred_region
          %s339 = sand.u32 %s37, 1
          %s340 = scalar_lea.sflag [#allocation4], %s339
          %s341 = sand.u32 %s37, 1
          %s342 = smul.addr %s341, 8
          %s343 = scalar_lea.vmem [#allocation3], %s342
          %s345 = ssub.s32 128, 128
          %346 = vsyncadd %s340, %s345
          %s347 = smul.addr %s27, 128
          %s348 = scalar_lea.hbm %s0, %s347
          %s350 = sshll.u32 %s343, 4
          %s351 = int_to_ptr.vmem [resolvable:$true] %s350
          %353 = dma.hbm_to_vmem [thread:$0]  %s348, 128, %s351, %s340
        $region52: #{tpu_custom_call.1} parent=47 // pred_fallthru
          _
      $region48: #{tpu_custom_call.1} parent=5 // pred_fallthru
        _
      %p354 = scmp.le.s32.totalorder 1, %s27
      %p355 = scmp.lt.s32.totalorder %s27, 3
      %p356 = pnand %p354, %p355
      %p357 = pneg %p356
      // Predicated region
      $region53: #{tpu_custom_call.1} parent=5 // pred_check
        _
      $region54: #{tpu_custom_call.1} parent=5 // pred_check_branch
        %359 = sbr.rel (%p356) target = $region56
      $region55: #{tpu_custom_call.1} parent=5 // pred_region
        %s360 = ssub.s32 %s27, 1
        %s361 = sand.u32 %s40, 1
        %s362 = scalar_lea.sflag [#allocation4], %s361
        %s363 = sand.u32 %s40, 1
        %s364 = smul.addr %s363, 8
        %s365 = scalar_lea.vmem [#allocation3], %s364
        // Predicated region
        $region57: #{tpu_custom_call.1} parent=55 // pred_check
          %p366 = pneg %p53
        $region58: #{tpu_custom_call.1} parent=55 // pred_check_branch
          %368 = sbr.rel (%p366) target = $region60
        $region59: #{tpu_custom_call.1} parent=55 // pred_region
          %369 = dma.done %s362, 128
        $region60: #{tpu_custom_call.1} parent=55 // pred_fallthru
          _
        // Predicated region
        $region61: #{tpu_custom_call.1} parent=55 // pred_check
          %p370 = pneg %p137
        $region62: #{tpu_custom_call.1} parent=55 // pred_check_branch
          %372 = sbr.rel (%p370) target = $region64
        $region63: #{tpu_custom_call.1} parent=55 // pred_region
          %373 = dma.done [#allocation7], 512
        $region64: #{tpu_custom_call.1} parent=55 // pred_fallthru
          _
        // Predicated region
        $region65: #{tpu_custom_call.1} parent=55 // pred_check
          %p374 = pneg %p158
        $region66: #{tpu_custom_call.1} parent=55 // pred_check_branch
          %376 = sbr.rel (%p374) target = $region68
        $region67: #{tpu_custom_call.1} parent=55 // pred_region
          %377 = dma.done [#allocation7], 512
        $region68: #{tpu_custom_call.1} parent=55 // pred_fallthru
          _
        %s378 = sand.u32 %s40, 1
        %s379 = scalar_lea.sflag [#allocation4], %s378
        %s380 = sand.u32 %s40, 1
        %s381 = smul.addr %s380, 8
        %s382 = scalar_lea.vmem [#allocation3], %s381
        %p383 = pneg %p53
        %p384 = pneg %p50
        %p385 = pneg %p74
        %p386 = pneg %p71
        %p387 = pneg %p95
        %p388 = pneg %p92
        %p389 = pneg %p116
        %p390 = pneg %p113
        %p391 = pneg %p137
        %p392 = pneg %p134
        %p393 = pneg %p158
        %p394 = pneg %p155
        %p395 = pneg %p179
        %p396 = pneg %p176
        %p397 = pneg %p200
        %p398 = pneg %p197
        %p399 = pneg %p221
        %p400 = pneg %p218
        %p401 = pneg %p247
        %p402 = pneg %p244
        %s403 = sand.u32 %s234, 1
        %s404 = scalar_lea.sflag [#allocation5], %s403
        %s405 = sand.u32 %s234, 1
        %s406 = smul.addr %s405, 8
        %s407 = scalar_lea.vmem [#allocation9], %s406
        %p408 = pneg %p273
        %p409 = pneg %p270
        %s410 = sand.u32 %s260, 1
        %s411 = scalar_lea.sflag [#allocation11], %s410
        %s412 = sand.u32 %s260, 1
        %s413 = smul.addr %s412, 8
        %s414 = scalar_lea.vmem [#allocation10], %s413
        %v415 = vld [vmem:[%s365] sm:$0xff]
        %v416 = vld [vmem:[%s7] sm:$0x1]
        %v417 = vld [vmem:[%s7 + $0x1] sm:$0x1]
        %v418 = vld [vmem:[%s7 + $0x2] sm:$0x1]
        %v419 = vld [vmem:[%s7 + $0x3] sm:$0x1]
        %v420 = vld [vmem:[%s7 + $0x4] sm:$0x1]
        %v421 = vld [vmem:[%s7 + $0x5] sm:$0x1]
        %v422 = vld [vmem:[%s7 + $0x6] sm:$0x1]
        %v423 = vld [vmem:[%s7 + $0x7] sm:$0x1]
        %v424 = vld [vmem:[%s7 + $0x8] sm:$0x1]
        %v425 = vld [vmem:[%s1] sm:$0xff]
        %v426 = vld [vmem:[%s1 + $0x8] sm:$0xff]
        %v427 = vld [vmem:[%s1 + $0x10] sm:$0xff]
        %v428 = vld [vmem:[%s1 + $0x18] sm:$0xff]
        %v429 = vlaneseq
        %v430 = vshrl.u32 %v429, 7
        %v431 = vsub.s32 0, %v430
        %v432 = vrot.slane %v416, %v431
        %vm433 = vcmask 261120
        %v435 = vsel %vm433, %v415, 0
        %437 = vmatprep.subr.mxu0 0.0
        %438 = vmatpush1.msra.mxu0 %v425
        %439 = vmatprep.subr.mxu0 0.0
        %440 = vmatpush1.msra.mxu0 %v426
        %441 = vmatprep.subr.mxu0 0.0
        %442 = vmatpush1.msra.mxu0 %v427
        %443 = vmatprep.subr.mxu0 0.0
        %444 = vmatpush1.msra.mxu0 %v428
        %445 = vmatprep.subr.mxu0 0.0
        %446 = vmatpush1.msra.mxu0 0.0
        %447 = vmatprep.subr.mxu0 0.0
        %448 = vmatpush1.msra.mxu0 0.0
        %449 = vmatprep.subr.mxu0 0.0
        %450 = vmatpush1.msra.mxu0 0.0
        %451 = vmatprep.subr.mxu0 0.0
        %452 = vmatpush1.msra.mxu0 0.0
        %453 = vmatprep.subr.mxu0 0.0
        %454 = vmatpush1.msra.mxu0 0.0
        %455 = vmatprep.subr.mxu0 0.0
        %456 = vmatpush1.msra.mxu0 0.0
        %457 = vmatprep.subr.mxu0 0.0
        %458 = vmatpush1.msra.mxu0 0.0
        %459 = vmatprep.subr.mxu0 0.0
        %460 = vmatpush1.msra.mxu0 0.0
        %461 = vmatprep.subr.mxu0 0.0
        %462 = vmatpush1.msra.mxu0 0.0
        %463 = vmatprep.subr.mxu0 0.0
        %464 = vmatpush1.msra.mxu0 0.0
        %465 = vmatprep.subr.mxu0 0.0
        %466 = vmatpush1.msra.mxu0 0.0
        %467 = vmatprep.subr.mxu0 0.0
        %468 = vmatpush1.msra.mxu0 0.0
        %469 = vmatprep.subr.mxu0 0.0
        %470 = vmatpush1.msra.mxu0 0.0
        %471 = vmatprep.subr.mxu0 0.0
        %472 = vmatpush1.msra.mxu0 0.0
        %473 = vmatprep.subr.mxu0 0.0
        %474 = vmatpush1.msra.mxu0 0.0
        %475 = vmatprep.subr.mxu0 0.0
        %476 = vmatpush1.msra.mxu0 0.0
        %477 = vmatprep.subr.mxu0 0.0
        %478 = vmatpush1.msra.mxu0 0.0
        %479 = vmatprep.subr.mxu0 0.0
        %480 = vmatpush1.msra.mxu0 0.0
        %481 = vmatprep.subr.mxu0 0.0
        %482 = vmatpush1.msra.mxu0 0.0
        %483 = vmatprep.subr.mxu0 0.0
        %484 = vmatpush1.msra.mxu0 0.0
        %485 = vmatprep.subr.mxu0 0.0
        %486 = vmatpush1.msra.mxu0 0.0
        %487 = vmatprep.subr.mxu0 0.0
        %488 = vmatpush1.msra.mxu0 0.0
        %489 = vmatprep.subr.mxu0 0.0
        %490 = vmatpush1.msra.mxu0 0.0
        %491 = vmatprep.subr.mxu0 0.0
        %492 = vmatpush1.msra.mxu0 0.0
        %493 = vmatprep.subr.mxu0 0.0
        %494 = vmatpush1.msra.mxu0 0.0
        %495 = vmatprep.subr.mxu0 0.0
        %496 = vmatpush1.msra.mxu0 0.0
        %497 = vmatprep.subr.mxu0 0.0
        %498 = vmatpush1.msra.mxu0 0.0
        %499 = vmatprep.subr.mxu0 0.0
        %500 = vmatpush1.msra.mxu0 0.0
        %501 = vmatprep.mubr.f32.mxu0 0.0
        %502 = vmatmul.mubr.f32.gmra.mrb[0].mxu0 %v435
        %v503 = vpop.f32.mrb[0].mxu0
        %v504 = vadd.f32 %v432, %v503
        %v505 = vpop.f32.mrb[0].mxu0
        %506 = vdwg.mxu0
        %v507 = vld [vmem:[%s2] sm:$0xff]
        %v508 = vld [vmem:[%s2 + $0x8] sm:$0xff]
        %v509 = vld [vmem:[%s2 + $0x10] sm:$0xff]
        %v510 = vld [vmem:[%s2 + $0x18] sm:$0xff]
        %v511 = vlaneseq
        %v512 = vshrl.u32 %v511, 7
        %v513 = vsub.s32 0, %v512
        %v514 = vrot.slane %v417, %v513
        %515 = vmatprep.subr.mxu0 0.0
        %516 = vmatpush1.msra.mxu0 %v507
        %517 = vmatprep.subr.mxu0 0.0
        %518 = vmatpush1.msra.mxu0 %v508
        %519 = vmatprep.subr.mxu0 0.0
        %520 = vmatpush1.msra.mxu0 %v509
        %521 = vmatprep.subr.mxu0 0.0
        %522 = vmatpush1.msra.mxu0 %v510
        %523 = vmatprep.subr.mxu0 0.0
        %524 = vmatpush1.msra.mxu0 0.0
        %525 = vmatprep.subr.mxu0 0.0
        %526 = vmatpush1.msra.mxu0 0.0
        %527 = vmatprep.subr.mxu0 0.0
        %528 = vmatpush1.msra.mxu0 0.0
        %529 = vmatprep.subr.mxu0 0.0
        %530 = vmatpush1.msra.mxu0 0.0
        %531 = vmatprep.subr.mxu0 0.0
        %532 = vmatpush1.msra.mxu0 0.0
        %533 = vmatprep.subr.mxu0 0.0
        %534 = vmatpush1.msra.mxu0 0.0
        %535 = vmatprep.subr.mxu0 0.0
        %536 = vmatpush1.msra.mxu0 0.0
        %537 = vmatprep.subr.mxu0 0.0
        %538 = vmatpush1.msra.mxu0 0.0
        %539 = vmatprep.subr.mxu0 0.0
        %540 = vmatpush1.msra.mxu0 0.0
        %541 = vmatprep.subr.mxu0 0.0
        %542 = vmatpush1.msra.mxu0 0.0
        %543 = vmatprep.subr.mxu0 0.0
        %544 = vmatpush1.msra.mxu0 0.0
        %545 = vmatprep.subr.mxu0 0.0
        %546 = vmatpush1.msra.mxu0 0.0
        %547 = vmatprep.subr.mxu0 0.0
        %548 = vmatpush1.msra.mxu0 0.0
        %549 = vmatprep.subr.mxu0 0.0
        %550 = vmatpush1.msra.mxu0 0.0
        %551 = vmatprep.subr.mxu0 0.0
        %552 = vmatpush1.msra.mxu0 0.0
        %553 = vmatprep.subr.mxu0 0.0
        %554 = vmatpush1.msra.mxu0 0.0
        %555 = vmatprep.subr.mxu0 0.0
        %556 = vmatpush1.msra.mxu0 0.0
        %557 = vmatprep.subr.mxu0 0.0
        %558 = vmatpush1.msra.mxu0 0.0
        %559 = vmatprep.subr.mxu0 0.0
        %560 = vmatpush1.msra.mxu0 0.0
        %561 = vmatprep.subr.mxu0 0.0
        %562 = vmatpush1.msra.mxu0 0.0
        %563 = vmatprep.subr.mxu0 0.0
        %564 = vmatpush1.msra.mxu0 0.0
        %565 = vmatprep.subr.mxu0 0.0
        %566 = vmatpush1.msra.mxu0 0.0
        %567 = vmatprep.subr.mxu0 0.0
        %568 = vmatpush1.msra.mxu0 0.0
        %569 = vmatprep.subr.mxu0 0.0
        %570 = vmatpush1.msra.mxu0 0.0
        %571 = vmatprep.subr.mxu0 0.0
        %572 = vmatpush1.msra.mxu0 0.0
        %573 = vmatprep.subr.mxu0 0.0
        %574 = vmatpush1.msra.mxu0 0.0
        %575 = vmatprep.subr.mxu0 0.0
        %576 = vmatpush1.msra.mxu0 0.0
        %577 = vmatprep.subr.mxu0 0.0
        %578 = vmatpush1.msra.mxu0 0.0
        %579 = vmatprep.mubr.f32.mxu0 0.0
        %580 = vmatmul.mubr.f32.gmra.mrb[0].mxu0 %v435
        %v581 = vpop.f32.mrb[0].mxu0
        %v582 = vadd.f32 %v514, %v581
        %v583 = vpop.f32.mrb[0].mxu0
        %584 = vdwg.mxu0
        %v585 = vld [vmem:[%s3] sm:$0xff]
        %v586 = vld [vmem:[%s3 + $0x8] sm:$0xff]
        %v587 = vld [vmem:[%s3 + $0x10] sm:$0xff]
        %v588 = vld [vmem:[%s3 + $0x18] sm:$0xff]
        %v589 = vlaneseq
        %v590 = vshrl.u32 %v589, 7
        %v591 = vsub.s32 0, %v590
        %v592 = vrot.slane %v418, %v591
        %593 = vmatprep.subr.mxu0 0.0
        %594 = vmatpush1.msra.mxu0 %v585
        %595 = vmatprep.subr.mxu0 0.0
        %596 = vmatpush1.msra.mxu0 %v586
        %597 = vmatprep.subr.mxu0 0.0
        %598 = vmatpush1.msra.mxu0 %v587
        %599 = vmatprep.subr.mxu0 0.0
        %600 = vmatpush1.msra.mxu0 %v588
        %601 = vmatprep.subr.mxu0 0.0
        %602 = vmatpush1.msra.mxu0 0.0
        %603 = vmatprep.subr.mxu0 0.0
        %604 = vmatpush1.msra.mxu0 0.0
        %605 = vmatprep.subr.mxu0 0.0
        %606 = vmatpush1.msra.mxu0 0.0
        %607 = vmatprep.subr.mxu0 0.0
        %608 = vmatpush1.msra.mxu0 0.0
        %609 = vmatprep.subr.mxu0 0.0
        %610 = vmatpush1.msra.mxu0 0.0
        %611 = vmatprep.subr.mxu0 0.0
        %612 = vmatpush1.msra.mxu0 0.0
        %613 = vmatprep.subr.mxu0 0.0
        %614 = vmatpush1.msra.mxu0 0.0
        %615 = vmatprep.subr.mxu0 0.0
        %616 = vmatpush1.msra.mxu0 0.0
        %617 = vmatprep.subr.mxu0 0.0
        %618 = vmatpush1.msra.mxu0 0.0
        %619 = vmatprep.subr.mxu0 0.0
        %620 = vmatpush1.msra.mxu0 0.0
        %621 = vmatprep.subr.mxu0 0.0
        %622 = vmatpush1.msra.mxu0 0.0
        %623 = vmatprep.subr.mxu0 0.0
        %624 = vmatpush1.msra.mxu0 0.0
        %625 = vmatprep.subr.mxu0 0.0
        %626 = vmatpush1.msra.mxu0 0.0
        %627 = vmatprep.subr.mxu0 0.0
        %628 = vmatpush1.msra.mxu0 0.0
        %629 = vmatprep.subr.mxu0 0.0
        %630 = vmatpush1.msra.mxu0 0.0
        %631 = vmatprep.subr.mxu0 0.0
        %632 = vmatpush1.msra.mxu0 0.0
        %633 = vmatprep.subr.mxu0 0.0
        %634 = vmatpush1.msra.mxu0 0.0
        %635 = vmatprep.subr.mxu0 0.0
        %636 = vmatpush1.msra.mxu0 0.0
        %637 = vmatprep.subr.mxu0 0.0
        %638 = vmatpush1.msra.mxu0 0.0
        %639 = vmatprep.subr.mxu0 0.0
        %640 = vmatpush1.msra.mxu0 0.0
        %641 = vmatprep.subr.mxu0 0.0
        %642 = vmatpush1.msra.mxu0 0.0
        %643 = vmatprep.subr.mxu0 0.0
        %644 = vmatpush1.msra.mxu0 0.0
        %645 = vmatprep.subr.mxu0 0.0
        %646 = vmatpush1.msra.mxu0 0.0
        %647 = vmatprep.subr.mxu0 0.0
        %648 = vmatpush1.msra.mxu0 0.0
        %649 = vmatprep.subr.mxu0 0.0
        %650 = vmatpush1.msra.mxu0 0.0
        %651 = vmatprep.subr.mxu0 0.0
        %652 = vmatpush1.msra.mxu0 0.0
        %653 = vmatprep.subr.mxu0 0.0
        %654 = vmatpush1.msra.mxu0 0.0
        %655 = vmatprep.subr.mxu0 0.0
        %656 = vmatpush1.msra.mxu0 0.0
        %657 = vmatprep.mubr.f32.mxu0 0.0
        %658 = vmatmul.mubr.f32.gmra.mrb[0].mxu0 %v435
        %v659 = vpop.f32.mrb[0].mxu0
        %v660 = vadd.f32 %v592, %v659
        %v661 = vpop.f32.mrb[0].mxu0
        %662 = vdwg.mxu0
        %v663 = vmul.f32 %v504, 0.35355338
        %vm664 = vcmask 64512
        %v666 = vsel %vm664, %v663, 0
        %v669 = vsel %vm664, %v582, 0
        %671 = vmatprep.subr.mxu0 0.0
        %672 = vmatpush1.xpose.msra.mxu0 %v669
        %673 = vmatprep.subr.mxu0 0.0
        %674 = vmatpush1.xpose.msra.mxu0 0.0
        %675 = vmatprep.subr.mxu0 0.0
        %676 = vmatpush1.xpose.msra.mxu0 0.0
        %677 = vmatprep.subr.mxu0 0.0
        %678 = vmatpush1.xpose.msra.mxu0 0.0
        %679 = vmatprep.subr.mxu0 0.0
        %680 = vmatpush1.xpose.msra.mxu0 0.0
        %681 = vmatprep.subr.mxu0 0.0
        %682 = vmatpush1.xpose.msra.mxu0 0.0
        %683 = vmatprep.subr.mxu0 0.0
        %684 = vmatpush1.xpose.msra.mxu0 0.0
        %685 = vmatprep.subr.mxu0 0.0
        %686 = vmatpush1.xpose.msra.mxu0 0.0
        %687 = vmatprep.subr.mxu0 0.0
        %688 = vmatpush1.xpose.msra.mxu0 0.0
        %689 = vmatprep.subr.mxu0 0.0
        %690 = vmatpush1.xpose.msra.mxu0 0.0
        %691 = vmatprep.subr.mxu0 0.0
        %692 = vmatpush1.xpose.msra.mxu0 0.0
        %693 = vmatprep.subr.mxu0 0.0
        %694 = vmatpush1.xpose.msra.mxu0 0.0
        %695 = vmatprep.subr.mxu0 0.0
        %696 = vmatpush1.xpose.msra.mxu0 0.0
        %697 = vmatprep.subr.mxu0 0.0
        %698 = vmatpush1.xpose.msra.mxu0 0.0
        %699 = vmatprep.subr.mxu0 0.0
        %700 = vmatpush1.xpose.msra.mxu0 0.0
        %701 = vmatprep.subr.mxu0 0.0
        %702 = vmatpush1.xpose.msra.mxu0 0.0
        %703 = vmatprep.subr.mxu0 0.0
        %704 = vmatpush1.xpose.msra.mxu0 0.0
        %705 = vmatprep.subr.mxu0 0.0
        %706 = vmatpush1.xpose.msra.mxu0 0.0
        %707 = vmatprep.subr.mxu0 0.0
        %708 = vmatpush1.xpose.msra.mxu0 0.0
        %709 = vmatprep.subr.mxu0 0.0
        %710 = vmatpush1.xpose.msra.mxu0 0.0
        %711 = vmatprep.subr.mxu0 0.0
        %712 = vmatpush1.xpose.msra.mxu0 0.0
        %713 = vmatprep.subr.mxu0 0.0
        %714 = vmatpush1.xpose.msra.mxu0 0.0
        %715 = vmatprep.subr.mxu0 0.0
        %716 = vmatpush1.xpose.msra.mxu0 0.0
        %717 = vmatprep.subr.mxu0 0.0
        %718 = vmatpush1.xpose.msra.mxu0 0.0
        %719 = vmatprep.subr.mxu0 0.0
        %720 = vmatpush1.xpose.msra.mxu0 0.0
        %721 = vmatprep.subr.mxu0 0.0
        %722 = vmatpush1.xpose.msra.mxu0 0.0
        %723 = vmatprep.subr.mxu0 0.0
        %724 = vmatpush1.xpose.msra.mxu0 0.0
        %725 = vmatprep.subr.mxu0 0.0
        %726 = vmatpush1.xpose.msra.mxu0 0.0
        %727 = vmatprep.subr.mxu0 0.0
        %728 = vmatpush1.xpose.msra.mxu0 0.0
        %729 = vmatprep.subr.mxu0 0.0
        %730 = vmatpush1.xpose.msra.mxu0 0.0
        %731 = vmatprep.subr.mxu0 0.0
        %732 = vmatpush1.xpose.msra.mxu0 0.0
        %733 = vmatprep.subr.mxu0 0.0
        %734 = vmatpush1.xpose.msra.mxu0 0.0
        %735 = vmatprep.mubr.f32.mxu0 0.0
        %736 = vmatmul.mubr.f32.gmra.mrb[0].mxu0 %v666
        %v737 = vpop.f32.mrb[0].mxu0
        %v738 = vadd.f32 0.0, %v737
        %v739 = vpop.f32.mrb[0].mxu0
        %740 = vdwg.mxu0
        %v741 = vsel %vm664, %v738, -inf
        %742 = vmax.xlane.f32.xlu0 %v741
        %v743 = vpop.xlane.xlu0 %742
        %v744 = vsub.f32 %v738, %v743
        %v745 = vmul.f32 %v744, 1.442695
        %v746 = vpow.pop %v745
        %v747 = vsel %vm664, %v746, 0.0
        %748 = vadd.xlane.f32.xlu0 %v747
        %v749 = vpop.xlane.xlu0 %748
        %v750 = vrcp.pop %v749
        %v751 = vmul.f32 %v746, %v750
        %752 = vst.msk [vmem:[%s414] sm:$0xff] %vm664, %v751
        %v754 = vsel %vm664, %v751, 0
        %756 = vmatprep.subr.mxu0 0.0
        %757 = vmatpush1.msra.mxu0 %v660
        %758 = vmatprep.subr.mxu0 0.0
        %759 = vmatpush1.msra.mxu0 0.0
        %760 = vmatprep.subr.mxu0 0.0
        %761 = vmatpush1.msra.mxu0 0.0
        %762 = vmatprep.subr.mxu0 0.0
        %763 = vmatpush1.msra.mxu0 0.0
        %764 = vmatprep.subr.mxu0 0.0
        %765 = vmatpush1.msra.mxu0 0.0
        %766 = vmatprep.subr.mxu0 0.0
        %767 = vmatpush1.msra.mxu0 0.0
        %768 = vmatprep.subr.mxu0 0.0
        %769 = vmatpush1.msra.mxu0 0.0
        %770 = vmatprep.subr.mxu0 0.0
        %771 = vmatpush1.msra.mxu0 0.0
        %772 = vmatprep.subr.mxu0 0.0
        %773 = vmatpush1.msra.mxu0 0.0
        %774 = vmatprep.subr.mxu0 0.0
        %775 = vmatpush1.msra.mxu0 0.0
        %776 = vmatprep.subr.mxu0 0.0
        %777 = vmatpush1.msra.mxu0 0.0
        %778 = vmatprep.subr.mxu0 0.0
        %779 = vmatpush1.msra.mxu0 0.0
        %780 = vmatprep.subr.mxu0 0.0
        %781 = vmatpush1.msra.mxu0 0.0
        %782 = vmatprep.subr.mxu0 0.0
        %783 = vmatpush1.msra.mxu0 0.0
        %784 = vmatprep.subr.mxu0 0.0
        %785 = vmatpush1.msra.mxu0 0.0
        %786 = vmatprep.subr.mxu0 0.0
        %787 = vmatpush1.msra.mxu0 0.0
        %788 = vmatprep.subr.mxu0 0.0
        %789 = vmatpush1.msra.mxu0 0.0
        %790 = vmatprep.subr.mxu0 0.0
        %791 = vmatpush1.msra.mxu0 0.0
        %792 = vmatprep.subr.mxu0 0.0
        %793 = vmatpush1.msra.mxu0 0.0
        %794 = vmatprep.subr.mxu0 0.0
        %795 = vmatpush1.msra.mxu0 0.0
        %796 = vmatprep.subr.mxu0 0.0
        %797 = vmatpush1.msra.mxu0 0.0
        %798 = vmatprep.subr.mxu0 0.0
        %799 = vmatpush1.msra.mxu0 0.0
        %800 = vmatprep.subr.mxu0 0.0
        %801 = vmatpush1.msra.mxu0 0.0
        %802 = vmatprep.subr.mxu0 0.0
        %803 = vmatpush1.msra.mxu0 0.0
        %804 = vmatprep.subr.mxu0 0.0
        %805 = vmatpush1.msra.mxu0 0.0
        %806 = vmatprep.subr.mxu0 0.0
        %807 = vmatpush1.msra.mxu0 0.0
        %808 = vmatprep.subr.mxu0 0.0
        %809 = vmatpush1.msra.mxu0 0.0
        %810 = vmatprep.subr.mxu0 0.0
        %811 = vmatpush1.msra.mxu0 0.0
        %812 = vmatprep.subr.mxu0 0.0
        %813 = vmatpush1.msra.mxu0 0.0
        %814 = vmatprep.subr.mxu0 0.0
        %815 = vmatpush1.msra.mxu0 0.0
        %816 = vmatprep.subr.mxu0 0.0
        %817 = vmatpush1.msra.mxu0 0.0
        %818 = vmatprep.subr.mxu0 0.0
        %819 = vmatpush1.msra.mxu0 0.0
        %820 = vmatprep.mubr.f32.mxu0 0.0
        %821 = vmatmul.mubr.f32.gmra.mrb[0].mxu0 %v754
        %v822 = vpop.f32.mrb[0].mxu0
        %v823 = vadd.f32 0.0, %v822
        %v824 = vpop.f32.mrb[0].mxu0
        %825 = vdwg.mxu0
        %826 = vst.msk [vmem:[#allocation2] sm:$0xff] %vm664, %v823
        %827 = vrot.lane.b32.xlu0 %v663, 120
        %v828 = vpop.permute.xlu0 %827
        %829 = vrot.lane.b32.xlu0 %v582, 120
        %v830 = vpop.permute.xlu0 %829
        %v831 = vsel %vm664, %v828, 0
        %v833 = vsel %vm664, %v830, 0
        %835 = vmatprep.subr.mxu0 0.0
        %836 = vmatpush1.xpose.msra.mxu0 %v833
        %837 = vmatprep.subr.mxu0 0.0
        %838 = vmatpush1.xpose.msra.mxu0 0.0
        %839 = vmatprep.subr.mxu0 0.0
        %840 = vmatpush1.xpose.msra.mxu0 0.0
        %841 = vmatprep.subr.mxu0 0.0
        %842 = vmatpush1.xpose.msra.mxu0 0.0
        %843 = vmatprep.subr.mxu0 0.0
        %844 = vmatpush1.xpose.msra.mxu0 0.0
        %845 = vmatprep.subr.mxu0 0.0
        %846 = vmatpush1.xpose.msra.mxu0 0.0
        %847 = vmatprep.subr.mxu0 0.0
        %848 = vmatpush1.xpose.msra.mxu0 0.0
        %849 = vmatprep.subr.mxu0 0.0
        %850 = vmatpush1.xpose.msra.mxu0 0.0
        %851 = vmatprep.subr.mxu0 0.0
        %852 = vmatpush1.xpose.msra.mxu0 0.0
        %853 = vmatprep.subr.mxu0 0.0
        %854 = vmatpush1.xpose.msra.mxu0 0.0
        %855 = vmatprep.subr.mxu0 0.0
        %856 = vmatpush1.xpose.msra.mxu0 0.0
        %857 = vmatprep.subr.mxu0 0.0
        %858 = vmatpush1.xpose.msra.mxu0 0.0
        %859 = vmatprep.subr.mxu0 0.0
        %860 = vmatpush1.xpose.msra.mxu0 0.0
        %861 = vmatprep.subr.mxu0 0.0
        %862 = vmatpush1.xpose.msra.mxu0 0.0
        %863 = vmatprep.subr.mxu0 0.0
        %864 = vmatpush1.xpose.msra.mxu0 0.0
        %865 = vmatprep.subr.mxu0 0.0
        %866 = vmatpush1.xpose.msra.mxu0 0.0
        %867 = vmatprep.subr.mxu0 0.0
        %868 = vmatpush1.xpose.msra.mxu0 0.0
        %869 = vmatprep.subr.mxu0 0.0
        %870 = vmatpush1.xpose.msra.mxu0 0.0
        %871 = vmatprep.subr.mxu0 0.0
        %872 = vmatpush1.xpose.msra.mxu0 0.0
        %873 = vmatprep.subr.mxu0 0.0
        %874 = vmatpush1.xpose.msra.mxu0 0.0
        %875 = vmatprep.subr.mxu0 0.0
        %876 = vmatpush1.xpose.msra.mxu0 0.0
        %877 = vmatprep.subr.mxu0 0.0
        %878 = vmatpush1.xpose.msra.mxu0 0.0
        %879 = vmatprep.subr.mxu0 0.0
        %880 = vmatpush1.xpose.msra.mxu0 0.0
        %881 = vmatprep.subr.mxu0 0.0
        %882 = vmatpush1.xpose.msra.mxu0 0.0
        %883 = vmatprep.subr.mxu0 0.0
        %884 = vmatpush1.xpose.msra.mxu0 0.0
        %885 = vmatprep.subr.mxu0 0.0
        %886 = vmatpush1.xpose.msra.mxu0 0.0
        %887 = vmatprep.subr.mxu0 0.0
        %888 = vmatpush1.xpose.msra.mxu0 0.0
        %889 = vmatprep.subr.mxu0 0.0
        %890 = vmatpush1.xpose.msra.mxu0 0.0
        %891 = vmatprep.subr.mxu0 0.0
        %892 = vmatpush1.xpose.msra.mxu0 0.0
        %893 = vmatprep.subr.mxu0 0.0
        %894 = vmatpush1.xpose.msra.mxu0 0.0
        %895 = vmatprep.subr.mxu0 0.0
        %896 = vmatpush1.xpose.msra.mxu0 0.0
        %897 = vmatprep.subr.mxu0 0.0
        %898 = vmatpush1.xpose.msra.mxu0 0.0
        %899 = vmatprep.mubr.f32.mxu0 0.0
        %900 = vmatmul.mubr.f32.gmra.mrb[0].mxu0 %v831
        %v901 = vpop.f32.mrb[0].mxu0
        %v902 = vadd.f32 0.0, %v901
        %v903 = vpop.f32.mrb[0].mxu0
        %904 = vdwg.mxu0
        %v905 = vsel %vm664, %v902, -inf
        %906 = vmax.xlane.f32.xlu0 %v905
        %v907 = vpop.xlane.xlu0 %906
        %v908 = vsub.f32 %v902, %v907
        %v909 = vmul.f32 %v908, 1.442695
        %v910 = vpow.pop %v909
        %v911 = vsel %vm664, %v910, 0.0
        %912 = vadd.xlane.f32.xlu0 %v911
        %v913 = vpop.xlane.xlu0 %912
        %v914 = vrcp.pop %v913
        %v915 = vmul.f32 %v910, %v914
        %917 = vrot.lane.b32.xlu0 %v915, 8
        %v918 = vpop.permute.xlu0 %917
        %vm920 = vcmask 130112
        %921 = vst.msk [vmem:[%s414] sm:$0xff] %vm920, %v918
        %923 = vrot.lane.b32.xlu0 %v660, 120
        %v924 = vpop.permute.xlu0 %923
        %v926 = vsel %vm664, %v915, 0
        %928 = vmatprep.subr.mxu0 0.0
        %929 = vmatpush1.msra.mxu0 %v924
        %930 = vmatprep.subr.mxu0 0.0
        %931 = vmatpush1.msra.mxu0 0.0
        %932 = vmatprep.subr.mxu0 0.0
        %933 = vmatpush1.msra.mxu0 0.0
        %934 = vmatprep.subr.mxu0 0.0
        %935 = vmatpush1.msra.mxu0 0.0
        %936 = vmatprep.subr.mxu0 0.0
        %937 = vmatpush1.msra.mxu0 0.0
        %938 = vmatprep.subr.mxu0 0.0
        %939 = vmatpush1.msra.mxu0 0.0
        %940 = vmatprep.subr.mxu0 0.0
        %941 = vmatpush1.msra.mxu0 0.0
        %942 = vmatprep.subr.mxu0 0.0
        %943 = vmatpush1.msra.mxu0 0.0
        %944 = vmatprep.subr.mxu0 0.0
        %945 = vmatpush1.msra.mxu0 0.0
        %946 = vmatprep.subr.mxu0 0.0
        %947 = vmatpush1.msra.mxu0 0.0
        %948 = vmatprep.subr.mxu0 0.0
        %949 = vmatpush1.msra.mxu0 0.0
        %950 = vmatprep.subr.mxu0 0.0
        %951 = vmatpush1.msra.mxu0 0.0
        %952 = vmatprep.subr.mxu0 0.0
        %953 = vmatpush1.msra.mxu0 0.0
        %954 = vmatprep.subr.mxu0 0.0
        %955 = vmatpush1.msra.mxu0 0.0
        %956 = vmatprep.subr.mxu0 0.0
        %957 = vmatpush1.msra.mxu0 0.0
        %958 = vmatprep.subr.mxu0 0.0
        %959 = vmatpush1.msra.mxu0 0.0
        %960 = vmatprep.subr.mxu0 0.0
        %961 = vmatpush1.msra.mxu0 0.0
        %962 = vmatprep.subr.mxu0 0.0
        %963 = vmatpush1.msra.mxu0 0.0
        %964 = vmatprep.subr.mxu0 0.0
        %965 = vmatpush1.msra.mxu0 0.0
        %966 = vmatprep.subr.mxu0 0.0
        %967 = vmatpush1.msra.mxu0 0.0
        %968 = vmatprep.subr.mxu0 0.0
        %969 = vmatpush1.msra.mxu0 0.0
        %970 = vmatprep.subr.mxu0 0.0
        %971 = vmatpush1.msra.mxu0 0.0
        %972 = vmatprep.subr.mxu0 0.0
        %973 = vmatpush1.msra.mxu0 0.0
        %974 = vmatprep.subr.mxu0 0.0
        %975 = vmatpush1.msra.mxu0 0.0
        %976 = vmatprep.subr.mxu0 0.0
        %977 = vmatpush1.msra.mxu0 0.0
        %978 = vmatprep.subr.mxu0 0.0
        %979 = vmatpush1.msra.mxu0 0.0
        %980 = vmatprep.subr.mxu0 0.0
        %981 = vmatpush1.msra.mxu0 0.0
        %982 = vmatprep.subr.mxu0 0.0
        %983 = vmatpush1.msra.mxu0 0.0
        %984 = vmatprep.subr.mxu0 0.0
        %985 = vmatpush1.msra.mxu0 0.0
        %986 = vmatprep.subr.mxu0 0.0
        %987 = vmatpush1.msra.mxu0 0.0
        %988 = vmatprep.subr.mxu0 0.0
        %989 = vmatpush1.msra.mxu0 0.0
        %990 = vmatprep.subr.mxu0 0.0
        %991 = vmatpush1.msra.mxu0 0.0
        %992 = vmatprep.mubr.f32.mxu0 0.0
        %993 = vmatmul.mubr.f32.gmra.mrb[0].mxu0 %v926
        %v994 = vpop.f32.mrb[0].mxu0
        %v995 = vadd.f32 0.0, %v994
        %v996 = vpop.f32.mrb[0].mxu0
        %997 = vdwg.mxu0
        %999 = vrot.lane.b32.xlu0 %v995, 8
        %v1000 = vpop.permute.xlu0 %999
        %1002 = vst.msk [vmem:[#allocation2] sm:$0xff] %vm920, %v1000
        %1003 = vrot.lane.b32.xlu0 %v663, 112
        %v1004 = vpop.permute.xlu0 %1003
        %1005 = vrot.lane.b32.xlu0 %v582, 112
        %v1006 = vpop.permute.xlu0 %1005
        %v1007 = vsel %vm664, %v1004, 0
        %v1009 = vsel %vm664, %v1006, 0
        %1011 = vmatprep.subr.mxu0 0.0
        %1012 = vmatpush1.xpose.msra.mxu0 %v1009
        %1013 = vmatprep.subr.mxu0 0.0
        %1014 = vmatpush1.xpose.msra.mxu0 0.0
        %1015 = vmatprep.subr.mxu0 0.0
        %1016 = vmatpush1.xpose.msra.mxu0 0.0
        %1017 = vmatprep.subr.mxu0 0.0
        %1018 = vmatpush1.xpose.msra.mxu0 0.0
        %1019 = vmatprep.subr.mxu0 0.0
        %1020 = vmatpush1.xpose.msra.mxu0 0.0
        %1021 = vmatprep.subr.mxu0 0.0
        %1022 = vmatpush1.xpose.msra.mxu0 0.0
        %1023 = vmatprep.subr.mxu0 0.0
        %1024 = vmatpush1.xpose.msra.mxu0 0.0
        %1025 = vmatprep.subr.mxu0 0.0
        %1026 = vmatpush1.xpose.msra.mxu0 0.0
        %1027 = vmatprep.subr.mxu0 0.0
        %1028 = vmatpush1.xpose.msra.mxu0 0.0
        %1029 = vmatprep.subr.mxu0 0.0
        %1030 = vmatpush1.xpose.msra.mxu0 0.0
        %1031 = vmatprep.subr.mxu0 0.0
        %1032 = vmatpush1.xpose.msra.mxu0 0.0
        %1033 = vmatprep.subr.mxu0 0.0
        %1034 = vmatpush1.xpose.msra.mxu0 0.0
        %1035 = vmatprep.subr.mxu0 0.0
        %1036 = vmatpush1.xpose.msra.mxu0 0.0
        %1037 = vmatprep.subr.mxu0 0.0
        %1038 = vmatpush1.xpose.msra.mxu0 0.0
        %1039 = vmatprep.subr.mxu0 0.0
        %1040 = vmatpush1.xpose.msra.mxu0 0.0
        %1041 = vmatprep.subr.mxu0 0.0
        %1042 = vmatpush1.xpose.msra.mxu0 0.0
        %1043 = vmatprep.subr.mxu0 0.0
        %1044 = vmatpush1.xpose.msra.mxu0 0.0
        %1045 = vmatprep.subr.mxu0 0.0
        %1046 = vmatpush1.xpose.msra.mxu0 0.0
        %1047 = vmatprep.subr.mxu0 0.0
        %1048 = vmatpush1.xpose.msra.mxu0 0.0
        %1049 = vmatprep.subr.mxu0 0.0
        %1050 = vmatpush1.xpose.msra.mxu0 0.0
        %1051 = vmatprep.subr.mxu0 0.0
        %1052 = vmatpush1.xpose.msra.mxu0 0.0
        %1053 = vmatprep.subr.mxu0 0.0
        %1054 = vmatpush1.xpose.msra.mxu0 0.0
        %1055 = vmatprep.subr.mxu0 0.0
        %1056 = vmatpush1.xpose.msra.mxu0 0.0
        %1057 = vmatprep.subr.mxu0 0.0
        %1058 = vmatpush1.xpose.msra.mxu0 0.0
        %1059 = vmatprep.subr.mxu0 0.0
        %1060 = vmatpush1.xpose.msra.mxu0 0.0
        %1061 = vmatprep.subr.mxu0 0.0
        %1062 = vmatpush1.xpose.msra.mxu0 0.0
        %1063 = vmatprep.subr.mxu0 0.0
        %1064 = vmatpush1.xpose.msra.mxu0 0.0
        %1065 = vmatprep.subr.mxu0 0.0
        %1066 = vmatpush1.xpose.msra.mxu0 0.0
        %1067 = vmatprep.subr.mxu0 0.0
        %1068 = vmatpush1.xpose.msra.mxu0 0.0
        %1069 = vmatprep.subr.mxu0 0.0
        %1070 = vmatpush1.xpose.msra.mxu0 0.0
        %1071 = vmatprep.subr.mxu0 0.0
        %1072 = vmatpush1.xpose.msra.mxu0 0.0
        %1073 = vmatprep.subr.mxu0 0.0
        %1074 = vmatpush1.xpose.msra.mxu0 0.0
        %1075 = vmatprep.mubr.f32.mxu0 0.0
        %1076 = vmatmul.mubr.f32.gmra.mrb[0].mxu0 %v1007
        %v1077 = vpop.f32.mrb[0].mxu0
        %v1078 = vadd.f32 0.0, %v1077
        %v1079 = vpop.f32.mrb[0].mxu0
        %1080 = vdwg.mxu0
        %v1081 = vsel %vm664, %v1078, -inf
        %1082 = vmax.xlane.f32.xlu0 %v1081
        %v1083 = vpop.xlane.xlu0 %1082
        %v1084 = vsub.f32 %v1078, %v1083
        %v1085 = vmul.f32 %v1084, 1.442695
        %v1086 = vpow.pop %v1085
        %v1087 = vsel %vm664, %v1086, 0.0
        %1088 = vadd.xlane.f32.xlu0 %v1087
        %v1089 = vpop.xlane.xlu0 %1088
        %v1090 = vrcp.pop %v1089
        %v1091 = vmul.f32 %v1086, %v1090
        %1093 = vrot.lane.b32.xlu0 %v1091, 16
        %v1094 = vpop.permute.xlu0 %1093
        %vm1096 = vcmask 195712
        %1097 = vst.msk [vmem:[%s414] sm:$0xff] %vm1096, %v1094
        %1098 = vrot.lane.b32.xlu0 %v660, 112
        %v1099 = vpop.permute.xlu0 %1098
        %v1101 = vsel %vm664, %v1091, 0
        %1103 = vmatprep.subr.mxu0 0.0
        %1104 = vmatpush1.msra.mxu0 %v1099
        %1105 = vmatprep.subr.mxu0 0.0
        %1106 = vmatpush1.msra.mxu0 0.0
        %1107 = vmatprep.subr.mxu0 0.0
        %1108 = vmatpush1.msra.mxu0 0.0
        %1109 = vmatprep.subr.mxu0 0.0
        %1110 = vmatpush1.msra.mxu0 0.0
        %1111 = vmatprep.subr.mxu0 0.0
        %1112 = vmatpush1.msra.mxu0 0.0
        %1113 = vmatprep.subr.mxu0 0.0
        %1114 = vmatpush1.msra.mxu0 0.0
        %1115 = vmatprep.subr.mxu0 0.0
        %1116 = vmatpush1.msra.mxu0 0.0
        %1117 = vmatprep.subr.mxu0 0.0
        %1118 = vmatpush1.msra.mxu0 0.0
        %1119 = vmatprep.subr.mxu0 0.0
        %1120 = vmatpush1.msra.mxu0 0.0
        %1121 = vmatprep.subr.mxu0 0.0
        %1122 = vmatpush1.msra.mxu0 0.0
        %1123 = vmatprep.subr.mxu0 0.0
        %1124 = vmatpush1.msra.mxu0 0.0
        %1125 = vmatprep.subr.mxu0 0.0
        %1126 = vmatpush1.msra.mxu0 0.0
        %1127 = vmatprep.subr.mxu0 0.0
        %1128 = vmatpush1.msra.mxu0 0.0
        %1129 = vmatprep.subr.mxu0 0.0
        %1130 = vmatpush1.msra.mxu0 0.0
        %1131 = vmatprep.subr.mxu0 0.0
        %1132 = vmatpush1.msra.mxu0 0.0
        %1133 = vmatprep.subr.mxu0 0.0
        %1134 = vmatpush1.msra.mxu0 0.0
        %1135 = vmatprep.subr.mxu0 0.0
        %1136 = vmatpush1.msra.mxu0 0.0
        %1137 = vmatprep.subr.mxu0 0.0
        %1138 = vmatpush1.msra.mxu0 0.0
        %1139 = vmatprep.subr.mxu0 0.0
        %1140 = vmatpush1.msra.mxu0 0.0
        %1141 = vmatprep.subr.mxu0 0.0
        %1142 = vmatpush1.msra.mxu0 0.0
        %1143 = vmatprep.subr.mxu0 0.0
        %1144 = vmatpush1.msra.mxu0 0.0
        %1145 = vmatprep.subr.mxu0 0.0
        %1146 = vmatpush1.msra.mxu0 0.0
        %1147 = vmatprep.subr.mxu0 0.0
        %1148 = vmatpush1.msra.mxu0 0.0
        %1149 = vmatprep.subr.mxu0 0.0
        %1150 = vmatpush1.msra.mxu0 0.0
        %1151 = vmatprep.subr.mxu0 0.0
        %1152 = vmatpush1.msra.mxu0 0.0
        %1153 = vmatprep.subr.mxu0 0.0
        %1154 = vmatpush1.msra.mxu0 0.0
        %1155 = vmatprep.subr.mxu0 0.0
        %1156 = vmatpush1.msra.mxu0 0.0
        %1157 = vmatprep.subr.mxu0 0.0
        %1158 = vmatpush1.msra.mxu0 0.0
        %1159 = vmatprep.subr.mxu0 0.0
        %1160 = vmatpush1.msra.mxu0 0.0
        %1161 = vmatprep.subr.mxu0 0.0
        %1162 = vmatpush1.msra.mxu0 0.0
        %1163 = vmatprep.subr.mxu0 0.0
        %1164 = vmatpush1.msra.mxu0 0.0
        %1165 = vmatprep.subr.mxu0 0.0
        %1166 = vmatpush1.msra.mxu0 0.0
        %1167 = vmatprep.mubr.f32.mxu0 0.0
        %1168 = vmatmul.mubr.f32.gmra.mrb[0].mxu0 %v1101
        %v1169 = vpop.f32.mrb[0].mxu0
        %v1170 = vadd.f32 0.0, %v1169
        %v1171 = vpop.f32.mrb[0].mxu0
        %1172 = vdwg.mxu0
        %1174 = vrot.lane.b32.xlu0 %v1170, 16
        %v1175 = vpop.permute.xlu0 %1174
        %1177 = vst.msk [vmem:[#allocation2] sm:$0xff] %vm1096, %v1175
        %1178 = vrot.lane.b32.xlu0 %v663, 104
        %v1179 = vpop.permute.xlu0 %1178
        %1180 = vrot.lane.b32.xlu0 %v582, 104
        %v1181 = vpop.permute.xlu0 %1180
        %v1182 = vsel %vm664, %v1179, 0
        %v1184 = vsel %vm664, %v1181, 0
        %1186 = vmatprep.subr.mxu0 0.0
        %1187 = vmatpush1.xpose.msra.mxu0 %v1184
        %1188 = vmatprep.subr.mxu0 0.0
        %1189 = vmatpush1.xpose.msra.mxu0 0.0
        %1190 = vmatprep.subr.mxu0 0.0
        %1191 = vmatpush1.xpose.msra.mxu0 0.0
        %1192 = vmatprep.subr.mxu0 0.0
        %1193 = vmatpush1.xpose.msra.mxu0 0.0
        %1194 = vmatprep.subr.mxu0 0.0
        %1195 = vmatpush1.xpose.msra.mxu0 0.0
        %1196 = vmatprep.subr.mxu0 0.0
        %1197 = vmatpush1.xpose.msra.mxu0 0.0
        %1198 = vmatprep.subr.mxu0 0.0
        %1199 = vmatpush1.xpose.msra.mxu0 0.0
        %1200 = vmatprep.subr.mxu0 0.0
        %1201 = vmatpush1.xpose.msra.mxu0 0.0
        %1202 = vmatprep.subr.mxu0 0.0
        %1203 = vmatpush1.xpose.msra.mxu0 0.0
        %1204 = vmatprep.subr.mxu0 0.0
        %1205 = vmatpush1.xpose.msra.mxu0 0.0
        %1206 = vmatprep.subr.mxu0 0.0
        %1207 = vmatpush1.xpose.msra.mxu0 0.0
        %1208 = vmatprep.subr.mxu0 0.0
        %1209 = vmatpush1.xpose.msra.mxu0 0.0
        %1210 = vmatprep.subr.mxu0 0.0
        %1211 = vmatpush1.xpose.msra.mxu0 0.0
        %1212 = vmatprep.subr.mxu0 0.0
        %1213 = vmatpush1.xpose.msra.mxu0 0.0
        %1214 = vmatprep.subr.mxu0 0.0
        %1215 = vmatpush1.xpose.msra.mxu0 0.0
        %1216 = vmatprep.subr.mxu0 0.0
        %1217 = vmatpush1.xpose.msra.mxu0 0.0
        %1218 = vmatprep.subr.mxu0 0.0
        %1219 = vmatpush1.xpose.msra.mxu0 0.0
        %1220 = vmatprep.subr.mxu0 0.0
        %1221 = vmatpush1.xpose.msra.mxu0 0.0
        %1222 = vmatprep.subr.mxu0 0.0
        %1223 = vmatpush1.xpose.msra.mxu0 0.0
        %1224 = vmatprep.subr.mxu0 0.0
        %1225 = vmatpush1.xpose.msra.mxu0 0.0
        %1226 = vmatprep.subr.mxu0 0.0
        %1227 = vmatpush1.xpose.msra.mxu0 0.0
        %1228 = vmatprep.subr.mxu0 0.0
        %1229 = vmatpush1.xpose.msra.mxu0 0.0
        %1230 = vmatprep.subr.mxu0 0.0
        %1231 = vmatpush1.xpose.msra.mxu0 0.0
        %1232 = vmatprep.subr.mxu0 0.0
        %1233 = vmatpush1.xpose.msra.mxu0 0.0
        %1234 = vmatprep.subr.mxu0 0.0
        %1235 = vmatpush1.xpose.msra.mxu0 0.0
        %1236 = vmatprep.subr.mxu0 0.0
        %1237 = vmatpush1.xpose.msra.mxu0 0.0
        %1238 = vmatprep.subr.mxu0 0.0
        %1239 = vmatpush1.xpose.msra.mxu0 0.0
        %1240 = vmatprep.subr.mxu0 0.0
        %1241 = vmatpush1.xpose.msra.mxu0 0.0
        %1242 = vmatprep.subr.mxu0 0.0
        %1243 = vmatpush1.xpose.msra.mxu0 0.0
        %1244 = vmatprep.subr.mxu0 0.0
        %1245 = vmatpush1.xpose.msra.mxu0 0.0
        %1246 = vmatprep.subr.mxu0 0.0
        %1247 = vmatpush1.xpose.msra.mxu0 0.0
        %1248 = vmatprep.subr.mxu0 0.0
        %1249 = vmatpush1.xpose.msra.mxu0 0.0
        %1250 = vmatprep.mubr.f32.mxu0 0.0
        %1251 = vmatmul.mubr.f32.gmra.mrb[0].mxu0 %v1182
        %v1252 = vpop.f32.mrb[0].mxu0
        %v1253 = vadd.f32 0.0, %v1252
        %v1254 = vpop.f32.mrb[0].mxu0
        %1255 = vdwg.mxu0
        %v1256 = vsel %vm664, %v1253, -inf
        %1257 = vmax.xlane.f32.xlu0 %v1256
        %v1258 = vpop.xlane.xlu0 %1257
        %v1259 = vsub.f32 %v1253, %v1258
        %v1260 = vmul.f32 %v1259, 1.442695
        %v1261 = vpow.pop %v1260
        %v1262 = vsel %vm664, %v1261, 0.0
        %1263 = vadd.xlane.f32.xlu0 %v1262
        %v1264 = vpop.xlane.xlu0 %1263
        %v1265 = vrcp.pop %v1264
        %v1266 = vmul.f32 %v1261, %v1265
        %1268 = vrot.lane.b32.xlu0 %v1266, 24
        %v1269 = vpop.permute.xlu0 %1268
        %vm1271 = vcmask 261312
        %1272 = vst.msk [vmem:[%s414] sm:$0xff] %vm1271, %v1269
        %1273 = vrot.lane.b32.xlu0 %v660, 104
        %v1274 = vpop.permute.xlu0 %1273
        %v1276 = vsel %vm664, %v1266, 0
        %1278 = vmatprep.subr.mxu0 0.0
        %1279 = vmatpush1.msra.mxu0 %v1274
        %1280 = vmatprep.subr.mxu0 0.0
        %1281 = vmatpush1.msra.mxu0 0.0
        %1282 = vmatprep.subr.mxu0 0.0
        %1283 = vmatpush1.msra.mxu0 0.0
        %1284 = vmatprep.subr.mxu0 0.0
        %1285 = vmatpush1.msra.mxu0 0.0
        %1286 = vmatprep.subr.mxu0 0.0
        %1287 = vmatpush1.msra.mxu0 0.0
        %1288 = vmatprep.subr.mxu0 0.0
        %1289 = vmatpush1.msra.mxu0 0.0
        %1290 = vmatprep.subr.mxu0 0.0
        %1291 = vmatpush1.msra.mxu0 0.0
        %1292 = vmatprep.subr.mxu0 0.0
        %1293 = vmatpush1.msra.mxu0 0.0
        %1294 = vmatprep.subr.mxu0 0.0
        %1295 = vmatpush1.msra.mxu0 0.0
        %1296 = vmatprep.subr.mxu0 0.0
        %1297 = vmatpush1.msra.mxu0 0.0
        %1298 = vmatprep.subr.mxu0 0.0
        %1299 = vmatpush1.msra.mxu0 0.0
        %1300 = vmatprep.subr.mxu0 0.0
        %1301 = vmatpush1.msra.mxu0 0.0
        %1302 = vmatprep.subr.mxu0 0.0
        %1303 = vmatpush1.msra.mxu0 0.0
        %1304 = vmatprep.subr.mxu0 0.0
        %1305 = vmatpush1.msra.mxu0 0.0
        %1306 = vmatprep.subr.mxu0 0.0
        %1307 = vmatpush1.msra.mxu0 0.0
        %1308 = vmatprep.subr.mxu0 0.0
        %1309 = vmatpush1.msra.mxu0 0.0
        %1310 = vmatprep.subr.mxu0 0.0
        %1311 = vmatpush1.msra.mxu0 0.0
        %1312 = vmatprep.subr.mxu0 0.0
        %1313 = vmatpush1.msra.mxu0 0.0
        %1314 = vmatprep.subr.mxu0 0.0
        %1315 = vmatpush1.msra.mxu0 0.0
        %1316 = vmatprep.subr.mxu0 0.0
        %1317 = vmatpush1.msra.mxu0 0.0
        %1318 = vmatprep.subr.mxu0 0.0
        %1319 = vmatpush1.msra.mxu0 0.0
        %1320 = vmatprep.subr.mxu0 0.0
        %1321 = vmatpush1.msra.mxu0 0.0
        %1322 = vmatprep.subr.mxu0 0.0
        %1323 = vmatpush1.msra.mxu0 0.0
        %1324 = vmatprep.subr.mxu0 0.0
        %1325 = vmatpush1.msra.mxu0 0.0
        %1326 = vmatprep.subr.mxu0 0.0
        %1327 = vmatpush1.msra.mxu0 0.0
        %1328 = vmatprep.subr.mxu0 0.0
        %1329 = vmatpush1.msra.mxu0 0.0
        %1330 = vmatprep.subr.mxu0 0.0
        %1331 = vmatpush1.msra.mxu0 0.0
        %1332 = vmatprep.subr.mxu0 0.0
        %1333 = vmatpush1.msra.mxu0 0.0
        %1334 = vmatprep.subr.mxu0 0.0
        %1335 = vmatpush1.msra.mxu0 0.0
        %1336 = vmatprep.subr.mxu0 0.0
        %1337 = vmatpush1.msra.mxu0 0.0
        %1338 = vmatprep.subr.mxu0 0.0
        %1339 = vmatpush1.msra.mxu0 0.0
        %1340 = vmatprep.subr.mxu0 0.0
        %1341 = vmatpush1.msra.mxu0 0.0
        %1342 = vmatprep.mubr.f32.mxu0 0.0
        %1343 = vmatmul.mubr.f32.gmra.mrb[0].mxu0 %v1276
        %v1344 = vpop.f32.mrb[0].mxu0
        %v1345 = vadd.f32 0.0, %v1344
        %v1346 = vpop.f32.mrb[0].mxu0
        %1347 = vdwg.mxu0
        %1349 = vrot.lane.b32.xlu0 %v1345, 24
        %v1350 = vpop.permute.xlu0 %1349
        %1352 = vst.msk [vmem:[#allocation2] sm:$0xff] %vm1271, %v1350
        %v1353 = vld [vmem:[#allocation2] sm:$0xff]
        %v1354 = vld [vmem:[#allocation6] sm:$0xff]
        %v1355 = vld [vmem:[#allocation6 + $0x8] sm:$0xff]
        %v1356 = vld [vmem:[#allocation6 + $0x10] sm:$0xff]
        %v1357 = vld [vmem:[#allocation6 + $0x18] sm:$0xff]
        %v1358 = vlaneseq
        %v1359 = vshrl.u32 %v1358, 7
        %v1360 = vsub.s32 0, %v1359
        %v1361 = vrot.slane %v419, %v1360
        %v1363 = vsel %vm433, %v1353, 0
        %1365 = vmatprep.subr.mxu0 0.0
        %1366 = vmatpush1.msra.mxu0 %v1354
        %1367 = vmatprep.subr.mxu0 0.0
        %1368 = vmatpush1.msra.mxu0 %v1355
        %1369 = vmatprep.subr.mxu0 0.0
        %1370 = vmatpush1.msra.mxu0 %v1356
        %1371 = vmatprep.subr.mxu0 0.0
        %1372 = vmatpush1.msra.mxu0 %v1357
        %1373 = vmatprep.subr.mxu0 0.0
        %1374 = vmatpush1.msra.mxu0 0.0
        %1375 = vmatprep.subr.mxu0 0.0
        %1376 = vmatpush1.msra.mxu0 0.0
        %1377 = vmatprep.subr.mxu0 0.0
        %1378 = vmatpush1.msra.mxu0 0.0
        %1379 = vmatprep.subr.mxu0 0.0
        %1380 = vmatpush1.msra.mxu0 0.0
        %1381 = vmatprep.subr.mxu0 0.0
        %1382 = vmatpush1.msra.mxu0 0.0
        %1383 = vmatprep.subr.mxu0 0.0
        %1384 = vmatpush1.msra.mxu0 0.0
        %1385 = vmatprep.subr.mxu0 0.0
        %1386 = vmatpush1.msra.mxu0 0.0
        %1387 = vmatprep.subr.mxu0 0.0
        %1388 = vmatpush1.msra.mxu0 0.0
        %1389 = vmatprep.subr.mxu0 0.0
        %1390 = vmatpush1.msra.mxu0 0.0
        %1391 = vmatprep.subr.mxu0 0.0
        %1392 = vmatpush1.msra.mxu0 0.0
        %1393 = vmatprep.subr.mxu0 0.0
        %1394 = vmatpush1.msra.mxu0 0.0
        %1395 = vmatprep.subr.mxu0 0.0
        %1396 = vmatpush1.msra.mxu0 0.0
        %1397 = vmatprep.subr.mxu0 0.0
        %1398 = vmatpush1.msra.mxu0 0.0
        %1399 = vmatprep.subr.mxu0 0.0
        %1400 = vmatpush1.msra.mxu0 0.0
        %1401 = vmatprep.subr.mxu0 0.0
        %1402 = vmatpush1.msra.mxu0 0.0
        %1403 = vmatprep.subr.mxu0 0.0
        %1404 = vmatpush1.msra.mxu0 0.0
        %1405 = vmatprep.subr.mxu0 0.0
        %1406 = vmatpush1.msra.mxu0 0.0
        %1407 = vmatprep.subr.mxu0 0.0
        %1408 = vmatpush1.msra.mxu0 0.0
        %1409 = vmatprep.subr.mxu0 0.0
        %1410 = vmatpush1.msra.mxu0 0.0
        %1411 = vmatprep.subr.mxu0 0.0
        %1412 = vmatpush1.msra.mxu0 0.0
        %1413 = vmatprep.subr.mxu0 0.0
        %1414 = vmatpush1.msra.mxu0 0.0
        %1415 = vmatprep.subr.mxu0 0.0
        %1416 = vmatpush1.msra.mxu0 0.0
        %1417 = vmatprep.subr.mxu0 0.0
        %1418 = vmatpush1.msra.mxu0 0.0
        %1419 = vmatprep.subr.mxu0 0.0
        %1420 = vmatpush1.msra.mxu0 0.0
        %1421 = vmatprep.subr.mxu0 0.0
        %1422 = vmatpush1.msra.mxu0 0.0
        %1423 = vmatprep.subr.mxu0 0.0
        %1424 = vmatpush1.msra.mxu0 0.0
        %1425 = vmatprep.subr.mxu0 0.0
        %1426 = vmatpush1.msra.mxu0 0.0
        %1427 = vmatprep.subr.mxu0 0.0
        %1428 = vmatpush1.msra.mxu0 0.0
        %1429 = vmatprep.mubr.f32.mxu0 0.0
        %1430 = vmatmul.mubr.f32.gmra.mrb[0].mxu0 %v1363
        %v1431 = vpop.f32.mrb[0].mxu0
        %v1432 = vadd.f32 %v1361, %v1431
        %v1433 = vpop.f32.mrb[0].mxu0
        %1434 = vdwg.mxu0
        %v1435 = vadd.f32 %v415, %v1432
        %v1436 = vsel %vm433, %v1435, 0.0
        %1437 = vadd.xlane.f32.xlu0 %v1436
        %v1438 = vpop.xlane.xlu0 %1437
        %v1439 = vrcp.pop 32.0
        %v1440 = vmul.f32 %v1438, %v1439
        %v1441 = vsub.f32 %v1435, %v1440
        %v1442 = vmul.f32 %v1441, %v1441
        %v1443 = vsel %vm433, %v1442, 0.0
        %1444 = vadd.xlane.f32.xlu0 %v1443
        %v1445 = vpop.xlane.xlu0 %1444
        %v1446 = vmul.f32 %v1445, %v1439
        %v1447 = vadd.f32 %v1446, 1e-09
        %v1448 = vrsqrt.pop %v1447
        %v1449 = vmul.f32 %v1441, %v1448
        %v1450 = vlaneseq
        %v1451 = vshrl.u32 %v1450, 7
        %v1452 = vsub.s32 0, %v1451
        %v1453 = vrot.slane %v420, %v1452
        %v1454 = vmul.f32 %v1449, %v1453
        %v1455 = vlaneseq
        %v1456 = vshrl.u32 %v1455, 7
        %v1457 = vsub.s32 0, %v1456
        %v1458 = vrot.slane %v421, %v1457
        %v1459 = vadd.f32 %v1454, %v1458
        %v1460 = vld [vmem:[#allocation8] sm:$0xff]
        %v1461 = vld [vmem:[#allocation8 + $0x8] sm:$0xff]
        %v1462 = vld [vmem:[#allocation8 + $0x10] sm:$0xff]
        %v1463 = vld [vmem:[#allocation8 + $0x18] sm:$0xff]
        %v1464 = vld [vmem:[%s8] sm:$0x1]
        %v1466 = vlaneseq
        %v1467 = vshrl.u32 %v1466, 7
        %v1468 = vsub.s32 0, %v1467
        %v1469 = vrot.slane %v1464, %v1468
        %v1472 = vsel %vm433, %v1459, 0
        %1474 = vmatprep.subr.mxu0 0.0
        %1475 = vmatpush1.msra.mxu0 %v1460
        %1476 = vmatprep.subr.mxu0 0.0
        %1477 = vmatpush1.msra.mxu0 %v1461
        %1478 = vmatprep.subr.mxu0 0.0
        %1479 = vmatpush1.msra.mxu0 %v1462
        %1480 = vmatprep.subr.mxu0 0.0
        %1481 = vmatpush1.msra.mxu0 %v1463
        %1482 = vmatprep.subr.mxu0 0.0
        %1483 = vmatpush1.msra.mxu0 0.0
        %1484 = vmatprep.subr.mxu0 0.0
        %1485 = vmatpush1.msra.mxu0 0.0
        %1486 = vmatprep.subr.mxu0 0.0
        %1487 = vmatpush1.msra.mxu0 0.0
        %1488 = vmatprep.subr.mxu0 0.0
        %1489 = vmatpush1.msra.mxu0 0.0
        %1490 = vmatprep.subr.mxu0 0.0
        %1491 = vmatpush1.msra.mxu0 0.0
        %1492 = vmatprep.subr.mxu0 0.0
        %1493 = vmatpush1.msra.mxu0 0.0
        %1494 = vmatprep.subr.mxu0 0.0
        %1495 = vmatpush1.msra.mxu0 0.0
        %1496 = vmatprep.subr.mxu0 0.0
        %1497 = vmatpush1.msra.mxu0 0.0
        %1498 = vmatprep.subr.mxu0 0.0
        %1499 = vmatpush1.msra.mxu0 0.0
        %1500 = vmatprep.subr.mxu0 0.0
        %1501 = vmatpush1.msra.mxu0 0.0
        %1502 = vmatprep.subr.mxu0 0.0
        %1503 = vmatpush1.msra.mxu0 0.0
        %1504 = vmatprep.subr.mxu0 0.0
        %1505 = vmatpush1.msra.mxu0 0.0
        %1506 = vmatprep.subr.mxu0 0.0
        %1507 = vmatpush1.msra.mxu0 0.0
        %1508 = vmatprep.subr.mxu0 0.0
        %1509 = vmatpush1.msra.mxu0 0.0
        %1510 = vmatprep.subr.mxu0 0.0
        %1511 = vmatpush1.msra.mxu0 0.0
        %1512 = vmatprep.subr.mxu0 0.0
        %1513 = vmatpush1.msra.mxu0 0.0
        %1514 = vmatprep.subr.mxu0 0.0
        %1515 = vmatpush1.msra.mxu0 0.0
        %1516 = vmatprep.subr.mxu0 0.0
        %1517 = vmatpush1.msra.mxu0 0.0
        %1518 = vmatprep.subr.mxu0 0.0
        %1519 = vmatpush1.msra.mxu0 0.0
        %1520 = vmatprep.subr.mxu0 0.0
        %1521 = vmatpush1.msra.mxu0 0.0
        %1522 = vmatprep.subr.mxu0 0.0
        %1523 = vmatpush1.msra.mxu0 0.0
        %1524 = vmatprep.subr.mxu0 0.0
        %1525 = vmatpush1.msra.mxu0 0.0
        %1526 = vmatprep.subr.mxu0 0.0
        %1527 = vmatpush1.msra.mxu0 0.0
        %1528 = vmatprep.subr.mxu0 0.0
        %1529 = vmatpush1.msra.mxu0 0.0
        %1530 = vmatprep.subr.mxu0 0.0
        %1531 = vmatpush1.msra.mxu0 0.0
        %1532 = vmatprep.subr.mxu0 0.0
        %1533 = vmatpush1.msra.mxu0 0.0
        %1534 = vmatprep.subr.mxu0 0.0
        %1535 = vmatpush1.msra.mxu0 0.0
        %1536 = vmatprep.subr.mxu0 0.0
        %1537 = vmatpush1.msra.mxu0 0.0
        %1538 = vmatprep.mubr.f32.mxu0 0.0
        %1539 = vmatmul.mubr.f32.gmra.mrb[0].mxu0 %v1472
        %v1540 = vpop.f32.mrb[0].mxu0
        %v1541 = vadd.f32 %v1469, %v1540
        %v1542 = vpop.f32.mrb[0].mxu0
        %1543 = vdwg.mxu0
        %v1544 = vmax.f32 %v1541, 0.0
        %v1545 = vld [vmem:[%s6] sm:$0xff]
        %v1546 = vld [vmem:[%s6 + $0x8] sm:$0xff]
        %v1547 = vld [vmem:[%s6 + $0x10] sm:$0xff]
        %v1548 = vld [vmem:[%s6 + $0x18] sm:$0xff]
        %v1549 = vld [vmem:[%s6 + $0x20] sm:$0xff]
        %v1550 = vld [vmem:[%s6 + $0x28] sm:$0xff]
        %v1551 = vld [vmem:[%s6 + $0x30] sm:$0xff]
        %v1552 = vld [vmem:[%s6 + $0x38] sm:$0xff]
        %v1553 = vlaneseq
        %v1554 = vshrl.u32 %v1553, 7
        %v1555 = vsub.s32 0, %v1554
        %v1556 = vrot.slane %v422, %v1555
        %vm1557 = vcmask 523264
        %v1559 = vsel %vm1557, %v1544, 0
        %1561 = vmatprep.subr.mxu0 0.0
        %1562 = vmatpush1.msra.mxu0 %v1545
        %1563 = vmatprep.subr.mxu0 0.0
        %1564 = vmatpush1.msra.mxu0 %v1546
        %1565 = vmatprep.subr.mxu0 0.0
        %1566 = vmatpush1.msra.mxu0 %v1547
        %1567 = vmatprep.subr.mxu0 0.0
        %1568 = vmatpush1.msra.mxu0 %v1548
        %1569 = vmatprep.subr.mxu0 0.0
        %1570 = vmatpush1.msra.mxu0 %v1549
        %1571 = vmatprep.subr.mxu0 0.0
        %1572 = vmatpush1.msra.mxu0 %v1550
        %1573 = vmatprep.subr.mxu0 0.0
        %1574 = vmatpush1.msra.mxu0 %v1551
        %1575 = vmatprep.subr.mxu0 0.0
        %1576 = vmatpush1.msra.mxu0 %v1552
        %1577 = vmatprep.subr.mxu0 0.0
        %1578 = vmatpush1.msra.mxu0 0.0
        %1579 = vmatprep.subr.mxu0 0.0
        %1580 = vmatpush1.msra.mxu0 0.0
        %1581 = vmatprep.subr.mxu0 0.0
        %1582 = vmatpush1.msra.mxu0 0.0
        %1583 = vmatprep.subr.mxu0 0.0
        %1584 = vmatpush1.msra.mxu0 0.0
        %1585 = vmatprep.subr.mxu0 0.0
        %1586 = vmatpush1.msra.mxu0 0.0
        %1587 = vmatprep.subr.mxu0 0.0
        %1588 = vmatpush1.msra.mxu0 0.0
        %1589 = vmatprep.subr.mxu0 0.0
        %1590 = vmatpush1.msra.mxu0 0.0
        %1591 = vmatprep.subr.mxu0 0.0
        %1592 = vmatpush1.msra.mxu0 0.0
        %1593 = vmatprep.subr.mxu0 0.0
        %1594 = vmatpush1.msra.mxu0 0.0
        %1595 = vmatprep.subr.mxu0 0.0
        %1596 = vmatpush1.msra.mxu0 0.0
        %1597 = vmatprep.subr.mxu0 0.0
        %1598 = vmatpush1.msra.mxu0 0.0
        %1599 = vmatprep.subr.mxu0 0.0
        %1600 = vmatpush1.msra.mxu0 0.0
        %1601 = vmatprep.subr.mxu0 0.0
        %1602 = vmatpush1.msra.mxu0 0.0
        %1603 = vmatprep.subr.mxu0 0.0
        %1604 = vmatpush1.msra.mxu0 0.0
        %1605 = vmatprep.subr.mxu0 0.0
        %1606 = vmatpush1.msra.mxu0 0.0
        %1607 = vmatprep.subr.mxu0 0.0
        %1608 = vmatpush1.msra.mxu0 0.0
        %1609 = vmatprep.subr.mxu0 0.0
        %1610 = vmatpush1.msra.mxu0 0.0
        %1611 = vmatprep.subr.mxu0 0.0
        %1612 = vmatpush1.msra.mxu0 0.0
        %1613 = vmatprep.subr.mxu0 0.0
        %1614 = vmatpush1.msra.mxu0 0.0
        %1615 = vmatprep.subr.mxu0 0.0
        %1616 = vmatpush1.msra.mxu0 0.0
        %1617 = vmatprep.subr.mxu0 0.0
        %1618 = vmatpush1.msra.mxu0 0.0
        %1619 = vmatprep.subr.mxu0 0.0
        %1620 = vmatpush1.msra.mxu0 0.0
        %1621 = vmatprep.subr.mxu0 0.0
        %1622 = vmatpush1.msra.mxu0 0.0
        %1623 = vmatprep.subr.mxu0 0.0
        %1624 = vmatpush1.msra.mxu0 0.0
        %1625 = vmatprep.mubr.f32.mxu0 0.0
        %1626 = vmatmul.mubr.f32.gmra.mrb[0].mxu0 %v1559
        %v1627 = vpop.f32.mrb[0].mxu0
        %v1628 = vadd.f32 %v1556, %v1627
        %v1629 = vpop.f32.mrb[0].mxu0
        %1630 = vdwg.mxu0
        %v1631 = vadd.f32 %v1459, %v1628
        %v1632 = vsel %vm433, %v1631, 0.0
        %1633 = vadd.xlane.f32.xlu0 %v1632
        %v1634 = vpop.xlane.xlu0 %1633
        %v1635 = vmul.f32 %v1634, %v1439
        %v1636 = vsub.f32 %v1631, %v1635
        %v1637 = vmul.f32 %v1636, %v1636
        %v1638 = vsel %vm433, %v1637, 0.0
        %1639 = vadd.xlane.f32.xlu0 %v1638
        %v1640 = vpop.xlane.xlu0 %1639
        %v1641 = vmul.f32 %v1640, %v1439
        %v1642 = vadd.f32 %v1641, 1e-09
        %v1643 = vrsqrt.pop %v1642
        %v1644 = vmul.f32 %v1636, %v1643
        %v1645 = vlaneseq
        %v1646 = vshrl.u32 %v1645, 7
        %v1647 = vsub.s32 0, %v1646
        %v1648 = vrot.slane %v423, %v1647
        %v1649 = vmul.f32 %v1644, %v1648
        %v1650 = vlaneseq
        %v1651 = vshrl.u32 %v1650, 7
        %v1652 = vsub.s32 0, %v1651
        %v1653 = vrot.slane %v424, %v1652
        %v1654 = vadd.f32 %v1649, %v1653
        %1655 = vst.msk [vmem:[%s407] sm:$0xff] %vm433, %v1654
        %s1656 = sand.u32 %s234, 1
        %s1657 = scalar_lea.sflag [#allocation5], %s1656
        %s1658 = sand.u32 %s234, 1
        %s1659 = smul.addr %s1658, 8
        %s1660 = scalar_lea.vmem [#allocation9], %s1659
        %s1661 = sand.u32 %s260, 1
        %s1662 = scalar_lea.sflag [#allocation11], %s1661
        %s1663 = sand.u32 %s260, 1
        %s1664 = smul.addr %s1663, 8
        %s1665 = scalar_lea.vmem [#allocation10], %s1664
        // Predicated region
        $region69: #{tpu_custom_call.1} parent=55 // pred_check
          %p1666 = pneg %p244
        $region70: #{tpu_custom_call.1} parent=55 // pred_check_branch
          %1668 = sbr.rel (%p1666) target = $region72
        $region71: #{tpu_custom_call.1} parent=55 // pred_region
          %s1670 = ssub.s32 128, 128
          %1671 = vsyncadd %s1657, %s1670
          %s1672 = smul.addr %s32, 128
          %s1673 = scalar_lea.hbm %s9, %s1672
          %s1675 = sshll.u32 %s1660, 4
          %s1676 = int_to_ptr.vmem [resolvable:$true] %s1675
          %1678 = dma.vmem_to_hbm [thread:$0]  %s1676, 128, %s1673, %s1657
        $region72: #{tpu_custom_call.1} parent=55 // pred_fallthru
          _
        // Predicated region
        $region73: #{tpu_custom_call.1} parent=55 // pred_check
          %p1679 = pneg %p270
        $region74: #{tpu_custom_call.1} parent=55 // pred_check_branch
          %1681 = sbr.rel (%p1679) target = $region76
        $region75: #{tpu_custom_call.1} parent=55 // pred_region
          %s1683 = ssub.s32 128, 128
          %1684 = vsyncadd %s1662, %s1683
          %s1685 = smul.addr %s32, 128
          %s1686 = scalar_lea.hbm %s10, %s1685
          %s1688 = sshll.u32 %s1665, 4
          %s1689 = int_to_ptr.vmem [resolvable:$true] %s1688
          %1691 = dma.vmem_to_hbm [thread:$0]  %s1689, 128, %s1686, %s1662
        $region76: #{tpu_custom_call.1} parent=55 // pred_fallthru
          _
      $region56: #{tpu_custom_call.1} parent=5 // pred_fallthru
        _
      %p1692 = scmp.le.s32.totalorder 2, %s27
      // Predicated region
      $region77: #{tpu_custom_call.1} parent=5 // pred_check
        %p1693 = pneg %p1692
      $region78: #{tpu_custom_call.1} parent=5 // pred_check_branch
        %1695 = sbr.rel (%p1693) target = $region80
      $region79: #{tpu_custom_call.1} parent=5 // pred_region
        %s1696 = ssub.s32 %s27, 2
        // Predicated region
        $region81: #{tpu_custom_call.1} parent=79 // pred_check
          %p1697 = pneg %p250
        $region82: #{tpu_custom_call.1} parent=79 // pred_check_branch
          %1699 = sbr.rel (%p1697) target = $region84
        $region83: #{tpu_custom_call.1} parent=79 // pred_region
          %s1700 = sand.u32 %s235, 1
          %s1701 = scalar_lea.sflag [#allocation5], %s1700
          %s1702 = sand.u32 %s235, 1
          %s1703 = smul.addr %s1702, 8
          %s1704 = scalar_lea.vmem [#allocation9], %s1703
          %1705 = dma.done %s1701, 128
        $region84: #{tpu_custom_call.1} parent=79 // pred_fallthru
          _
        // Predicated region
        $region85: #{tpu_custom_call.1} parent=79 // pred_check
          %p1706 = pneg %p276
        $region86: #{tpu_custom_call.1} parent=79 // pred_check_branch
          %1708 = sbr.rel (%p1706) target = $region88
        $region87: #{tpu_custom_call.1} parent=79 // pred_region
          %s1709 = sand.u32 %s261, 1
          %s1710 = scalar_lea.sflag [#allocation11], %s1709
          %s1711 = sand.u32 %s261, 1
          %s1712 = smul.addr %s1711, 8
          %s1713 = scalar_lea.vmem [#allocation10], %s1712
          %1714 = dma.done %s1710, 128
        $region88: #{tpu_custom_call.1} parent=79 // pred_fallthru
          _
      $region80: #{tpu_custom_call.1} parent=5 // pred_fallthru
        _
    $region6: #{tpu_custom_call.1} parent=1 // loop_footer
      %s31 = sadd.s32 1, %s27
    $region7: #{tpu_custom_call.1} parent=1 // loop_footer_branch
      %26 = sbr.rel target = $region3
    $region8: #{tpu_custom_call.1} parent=1 // loop_exit
      _
    %1715 = vsyncpa [#allocation4], 1
    %s1716 = scalar_lea.sflag [#allocation4], 1
    %1717 = vsyncpa %s1716, 1
    %1718 = vsyncpa [#allocation7], 1
    %1719 = vsyncpa [#allocation5], 1
    %s1720 = scalar_lea.sflag [#allocation5], 1
    %1721 = vsyncpa %s1720, 1
    %1722 = vsyncpa [#allocation11], 1
    %s1723 = scalar_lea.sflag [#allocation11], 1
    %1724 = vsyncpa %s1723, 1

</llo_original>
